<compile_context>
chip_gen: v6e
topology: v6e:2x2x1
jax: 0.10.0
libtpu: 0.0.40
codegen_flags: <defaults>
</compile_context>

<pallas_src>
import functools

import jax
import jax.numpy as jnp
from jax.experimental import pallas as pl
from jax.experimental.pallas import tpu as pltpu


def _round_up(x, m):
    return -(-x // m) * m


def _attention_kernel(
    enc_ref,       # (TB*Np, E)  encoder_out rows, batch-major (bf16 or f32)
    dec_ref,       # (TB, D)     decoder_hidden tile (bf16 or f32)
    w_enc_t_ref,   # (E, A)      enc_attn.weight, pre-transposed
    w_dec_t_ref,   # (D, A)      dec_attn.weight, pre-transposed
    b_sum_ref,     # (1, A)      enc_attn.bias + dec_attn.bias (f32)
    w_ful_ref,     # (1, A)      ful_attn.weight as a row (f32)
    weighted_ref,  # (TB, E)     output: weighted encoding (f32)
    alpha_ref,     # (TB, Np)    output: attention weights (f32)
    *,
    tb: int,
    n: int,
    n_pad: int,
    approx_recip: bool,
):
    enc2 = enc_ref[...]                                   # (TB*Np, E), MXU dtype
    e_dim = enc2.shape[-1]
    a_dim = w_enc_t_ref.shape[-1]

    # ---- att1 = enc_attn(encoder_out): one big MXU matmul, no casts/reshapes
    att1 = jnp.dot(enc2, w_enc_t_ref[...],
                   preferred_element_type=jnp.float32)    # (TB*Np, A) f32
    att1 = att1.reshape(tb, n_pad, a_dim)                 # f32 split: layout no-op
                                                          # (n_pad % 8 == 0)

    # ---- att2 = dec_attn(decoder_hidden); both pre-ReLU biases folded once --
    att2 = jnp.dot(dec_ref[...], w_dec_t_ref[...],
                   preferred_element_type=jnp.float32)    # (TB, A) f32
    att2 = att2 + b_sum_ref[...]                          # (TB, A)

    # ---- relu(att1 + att2.unsqueeze(1)) -------------------------------------
    h = jnp.maximum(att1 + att2[:, None, :], 0.0)         # (TB, Np, A) f32

    # ---- ful_attn: width-1 output -> VPU multiply + lane reduce -------------
    # (ful_attn bias is a constant shift that cancels in the softmax.)
    scores = jnp.sum(h * w_ful_ref[...][None, :, :], axis=-1)   # (TB, Np) f32

    if n_pad != n:  # static branch: mask padded encoder positions out
        col = jax.lax.broadcasted_iota(jnp.int32, (1, n_pad), 1)
        scores = jnp.where(col < n, scores, -jnp.inf)

    # ---- softmax over N, lane-major ------------------------------------------
    m = jnp.max(scores, axis=-1, keepdims=True)           # (TB, 1)
    ex = jnp.exp(scores - m)                              # (TB, Np)
    denom = jnp.sum(ex, axis=-1, keepdims=True)           # (TB, 1)
    alpha = ex * pl.reciprocal(denom, approx=approx_recip)  # (TB, Np) f32

    # ---- weighted_encoding = sum_N encoder_out * alpha -----------------------
    # Scale the flat encoder rows (promotion bf16*f32 -> f32: no explicit cast
    # pass, no second f32 copy of the tile), then group-sum over N.
    alpha_col = alpha[:, :, None].reshape(tb * n_pad, 1)  # f32, layout no-op
    prod = enc2 * alpha_col                               # (TB*Np, E) f32
    weighted = prod.reshape(tb, n_pad, e_dim).sum(axis=1)  # (TB, E) f32

    weighted_ref[...] = weighted.astype(weighted_ref.dtype)
    alpha_ref[...] = alpha.astype(alpha_ref.dtype)


def attention_forward(encoder_out, decoder_hidden, params, *, tb=None,
                      use_bf16=True, approx_recip=False):
    """Additive attention forward pass with a Pallas TPU kernel.

    encoder_out   : (B, N, E) float32
    decoder_hidden: (B, D)    float32
    params        : dict with w_enc (A,E), b_enc (A,), w_dec (A,D), b_dec (A,),
                    w_ful (1,A), b_ful (1,)   (PyTorch nn.Linear convention)
    Returns (weighted_encoding (B,E) f32, alpha (B,N) f32).
    """
    B, N, E = encoder_out.shape
    D = decoder_hidden.shape[1]
    A = params["w_enc"].shape[0]

    # ---- one-time parameter plumbing (outside the kernel) -------------------
    # bf16 MXU operands are beneficial on every generation (v5e included:
    # its MXU is bf16-native and it has the least HBM bandwidth).
    mm_dtype = jnp.bfloat16 if use_bf16 else jnp.float32
    mm_bytes = 2 if use_bf16 else 4
    w_enc_t = params["w_enc"].T.astype(mm_dtype)                  # (E, A)
    w_dec_t = params["w_dec"].T.astype(mm_dtype)                  # (D, A)
    # Fold the two pre-ReLU biases into one row; drop ful_attn bias (cancels
    # in the softmax and neither pre-softmax score is an output).
    b_sum = (params["b_enc"] + params["b_dec"]).reshape(1, A).astype(jnp.float32)
    w_ful = params["w_ful"].reshape(1, A).astype(jnp.float32)

    enc = encoder_out.astype(mm_dtype)
    dec = decoder_hidden.astype(mm_dtype)

    # Pad N to a sublane multiple so every in-kernel f32 split/merge is a
    # layout no-op; padded positions are masked to -inf before the softmax.
    n_pad = _round_up(N, 8)
    if n_pad != N:
        enc = jnp.pad(enc, ((0, 0), (0, n_pad - N), (0, 0)))

    # ---- batch tile sizing ----------------------------------------------------
    # Per-batch-row VMEM cost of one pipelined grid step (double-buffered
    # enc/dec blocks, f32 att1+h, f32 weighted product, double-buffered outs).
    per_row = (2 * n_pad * E * mm_bytes
               + 2 * D * mm_bytes
               + 2 * n_pad * A * 4
               + n_pad * E * 4
               + 2 * (E + n_pad) * 4)
    vmem_budget = 20 * 1024 * 1024        # headroom under the 32 MiB scoped limit
    if tb is None:
        # Enough rows per att1 matmul to fill the MXU M dim (>= 256 on v6e/v7x),
        # rounded up to a sublane multiple.
        tb = _round_up(max(8, pl.cdiv(256, n_pad)), 8)
    tb = min(tb, max(8, (vmem_budget // per_row) // 8 * 8))   # v7x-safe VMEM cap
    b8 = _round_up(B, 8)
    tb = min(tb, b8)
    if b8 >= 16:
        # Keep >= 2 grid steps so ("parallel",) can shard tiles across the two
        # v7x TensorCores; negligible cost on single-TC v5e/v6e.
        tb = min(tb, max(8, ((b8 // 2) // 8) * 8))
    b_pad = _round_up(B, tb)
    if b_pad != B:
        enc = jnp.pad(enc, ((0, b_pad - B), (0, 0), (0, 0)))
        dec = jnp.pad(dec, ((0, b_pad - B), (0, 0)))

    # Free, row-major flatten: the kernel gets a 2-D MXU-ready lhs per tile.
    enc2 = enc.reshape(b_pad * n_pad, E)

    grid = (b_pad // tb,)
    kernel = functools.partial(
        _attention_kernel, tb=tb, n=N, n_pad=n_pad, approx_recip=approx_recip)

    in_specs = [
        pl.BlockSpec((tb * n_pad, E), lambda b: (b, 0)),   # encoder rows (flat)
        pl.BlockSpec((tb, D), lambda b: (b, 0)),           # decoder_hidden tile
        pl.BlockSpec((E, A), lambda b: (0, 0)),            # enc_attn.weight.T
        pl.BlockSpec((D, A), lambda b: (0, 0)),            # dec_attn.weight.T
        pl.BlockSpec((1, A), lambda b: (0, 0)),            # combined bias row
        pl.BlockSpec((1, A), lambda b: (0, 0)),            # ful_attn.weight row
    ]
    # NOTE: at realistic model sizes choose E (and ideally N) as multiples of
    # 128 so these stores are lane-dense (unmasked vst).
    out_specs = [
        pl.BlockSpec((tb, E), lambda b: (b, 0)),           # weighted encoding
        pl.BlockSpec((tb, n_pad), lambda b: (b, 0)),       # alpha
    ]
    out_shape = [
        jax.ShapeDtypeStruct((b_pad, E), jnp.float32),
        jax.ShapeDtypeStruct((b_pad, n_pad), jnp.float32),
    ]

    fn = pl.pallas_call(
        kernel,
        grid=grid,
        in_specs=in_specs,
        out_specs=out_specs,
        out_shape=out_shape,
        compiler_params=pltpu.CompilerParams(
            dimension_semantics=("parallel",),
            vmem_limit_bytes=32 * 1024 * 1024),   # covers the budget on v5e too
    )
    weighted, alpha = fn(enc2, dec, w_enc_t, w_dec_t, b_sum, w_ful)
    weighted = weighted[:B]
    alpha = alpha[:B, :N]
    return weighted, alpha


def attention_reference(encoder_out, decoder_hidden, params):
    """Pure-JAX reference matching the PyTorch module semantics (f32)."""
    att1 = encoder_out @ params["w_enc"].T + params["b_enc"]          # (B,N,A)
    att2 = decoder_hidden @ params["w_dec"].T + params["b_dec"]       # (B,A)
    h = jnp.maximum(att1 + att2[:, None, :], 0.0)                     # (B,N,A)
    att = (h @ params["w_ful"].T + params["b_ful"])[..., 0]           # (B,N)
    alpha = jax.nn.softmax(att, axis=1)                               # (B,N)
    weighted = jnp.sum(encoder_out * alpha[:, :, None], axis=1)       # (B,E)
    return weighted, alpha


if __name__ == "__main__":
    # Small shapes consistent with the module's forward pass; B chosen so the
    # batched grid still has 2 steps (TB = 16, N = 8 -> 128 rows per matmul).
    B, N = 32, 8           # batch, number of encoder positions
    E, D, A = 32, 16, 32   # encoder_dim, decoder_dim, attn_dim

    key = jax.random.PRNGKey(0)
    keys = jax.random.split(key, 8)

    encoder_out = jax.random.normal(keys[0], (B, N, E), dtype=jnp.float32)
    decoder_hidden = jax.random.normal(keys[1], (B, D), dtype=jnp.float32)

    # Deterministic parameter init (PyTorch nn.Linear shapes: (out, in)).
    params = {
        "w_enc": 0.1 * jax.random.normal(keys[2], (A, E), dtype=jnp.float32),
        "b_enc": 0.1 * jax.random.normal(keys[3], (A,), dtype=jnp.float32),
        "w_dec": 0.1 * jax.random.normal(keys[4], (A, D), dtype=jnp.float32),
        "b_dec": 0.1 * jax.random.normal(keys[5], (A,), dtype=jnp.float32),
        "w_ful": 0.1 * jax.random.normal(keys[6], (1, A), dtype=jnp.float32),
        "b_ful": 0.1 * jax.random.normal(keys[7], (1,), dtype=jnp.float32),
    }

    weighted_ref, alpha_ref = attention_reference(
        encoder_out, decoder_hidden, params)

    # Full-precision path with exact reciprocal: tight numerical check.
    w32, a32 = attention_forward(encoder_out, decoder_hidden, params,
                                 use_bf16=False, approx_recip=False)
    jax.block_until_ready((w32, a32))
    assert jnp.allclose(w32, weighted_ref, atol=1e-4, rtol=1e-4)
    assert jnp.allclose(a32, alpha_ref, atol=1e-4, rtol=1e-4)

    # bf16 MXU-operand fast path (+ EUP approx reciprocal): looser tolerance.
    # (weighted inherits bf16 quantization of encoder_out; accumulation is f32.)
    w16, a16 = attention_forward(encoder_out, decoder_hidden, params,
                                 use_bf16=True, approx_recip=True)
    jax.block_until_ready((w16, a16))
    assert jnp.allclose(w16, weighted_ref, atol=3e-2, rtol=3e-2)
    assert jnp.allclose(a16, alpha_ref, atol=3e-2, rtol=3e-2)

    print("KERNEL_OK")
</pallas_src>

<mosaic_0001>
module attributes {stable_mosaic.version = 11 : i64} {
  func.func @_attention_kernel(%arg0: i32, %arg1: memref<128x32xf32, #tpu.memory_space<vmem>>, %arg2: memref<16x16xf32, #tpu.memory_space<vmem>>, %arg3: memref<32x32xf32, #tpu.memory_space<vmem>>, %arg4: memref<16x32xf32, #tpu.memory_space<vmem>>, %arg5: memref<1x32xf32, #tpu.memory_space<vmem>>, %arg6: memref<1x32xf32, #tpu.memory_space<vmem>>, %arg7: memref<16x32xf32, #tpu.memory_space<vmem>>, %arg8: memref<16x8xf32, #tpu.memory_space<vmem>>) attributes {dimension_semantics = [#tpu.dimension_semantics<parallel>], iteration_bounds = array<i64: 2>, scalar_prefetch = 0 : i64, scratch_operands = 0 : i64, tpu.core_type = #tpu.core_type<tc>, window_params = [{transform_indices = @transform_0, window_bounds = array<i64: 128, 32>}, {transform_indices = @transform_1, window_bounds = array<i64: 16, 16>}, {pipeline_mode = #tpu.pipeline_mode<synchronous>, transform_indices = @transform_2, window_bounds = array<i64: 32, 32>}, {pipeline_mode = #tpu.pipeline_mode<synchronous>, transform_indices = @transform_3, window_bounds = array<i64: 16, 32>}, {pipeline_mode = #tpu.pipeline_mode<synchronous>, transform_indices = @transform_4, window_bounds = array<i64: 1, 32>}, {pipeline_mode = #tpu.pipeline_mode<synchronous>, transform_indices = @transform_5, window_bounds = array<i64: 1, 32>}, {transform_indices = @transform_6, window_bounds = array<i64: 16, 32>}, {transform_indices = @transform_7, window_bounds = array<i64: 16, 8>}]} {
    %c0 = arith.constant 0 : index
    %c0_0 = arith.constant 0 : index
    %0 = vector.load %arg1[%c0, %c0_0] : memref<128x32xf32, #tpu.memory_space<vmem>>, vector<128x32xf32>
    %c0_1 = arith.constant 0 : index
    %c0_2 = arith.constant 0 : index
    %1 = vector.load %arg3[%c0_1, %c0_2] : memref<32x32xf32, #tpu.memory_space<vmem>>, vector<32x32xf32>
    %cst = arith.constant dense<0.000000e+00> : vector<128x32xf32>
    %2 = tpu.matmul %0, %1, %cst {dimension_numbers = #tpu.dot_dimension_numbers<[1], [0], [0], [1], [0, 0, 1, 1], [], []>} : vector<128x32xf32>, vector<32x32xf32>, vector<128x32xf32> -> vector<128x32xf32>
    %3 = vector.shape_cast %2 : vector<128x32xf32> to vector<16x8x32xf32>
    %c0_3 = arith.constant 0 : index
    %c0_4 = arith.constant 0 : index
    %4 = vector.load %arg2[%c0_3, %c0_4] : memref<16x16xf32, #tpu.memory_space<vmem>>, vector<16x16xf32>
    %c0_5 = arith.constant 0 : index
    %c0_6 = arith.constant 0 : index
    %5 = vector.load %arg4[%c0_5, %c0_6] : memref<16x32xf32, #tpu.memory_space<vmem>>, vector<16x32xf32>
    %cst_7 = arith.constant dense<0.000000e+00> : vector<16x32xf32>
    %6 = tpu.matmul %4, %5, %cst_7 {dimension_numbers = #tpu.dot_dimension_numbers<[1], [0], [0], [1], [0, 0, 1, 1], [], []>} : vector<16x16xf32>, vector<16x32xf32>, vector<16x32xf32> -> vector<16x32xf32>
    %c0_8 = arith.constant 0 : index
    %c0_9 = arith.constant 0 : index
    %7 = vector.load %arg5[%c0_8, %c0_9] : memref<1x32xf32, #tpu.memory_space<vmem>>, vector<1x32xf32>
    %8 = vector.broadcast %7 : vector<1x32xf32> to vector<16x32xf32>
    %9 = arith.addf %6, %8 : vector<16x32xf32>
    %10 = vector.shape_cast %9 : vector<16x32xf32> to vector<16x1x32xf32>
    %11 = vector.broadcast %10 : vector<16x1x32xf32> to vector<16x8x32xf32>
    %12 = arith.addf %3, %11 : vector<16x8x32xf32>
    %cst_10 = arith.constant 0.000000e+00 : f32
    %13 = vector.broadcast %cst_10 : f32 to vector<16x8x32xf32>
    %14 = arith.maximumf %12, %13 : vector<16x8x32xf32>
    %c0_11 = arith.constant 0 : index
    %c0_12 = arith.constant 0 : index
    %15 = vector.load %arg6[%c0_11, %c0_12] : memref<1x32xf32, #tpu.memory_space<vmem>>, vector<1x32xf32>
    %16 = vector.shape_cast %15 : vector<1x32xf32> to vector<1x1x32xf32>
    %17 = vector.broadcast %16 : vector<1x1x32xf32> to vector<16x8x32xf32>
    %18 = arith.mulf %14, %17 : vector<16x8x32xf32>
    %cst_13 = arith.constant dense<0.000000e+00> : vector<16x8xf32>
    %19 = vector.multi_reduction <add>, %18, %cst_13 [2] : vector<16x8x32xf32> to vector<16x8xf32>
    %cst_14 = arith.constant dense<0xFF800000> : vector<16xf32>
    %20 = vector.multi_reduction <maximumf>, %19, %cst_14 [1] : vector<16x8xf32> to vector<16xf32>
    %21 = vector.shape_cast %20 : vector<16xf32> to vector<16x1xf32>
    %22 = vector.broadcast %21 : vector<16x1xf32> to vector<16x8xf32>
    %23 = arith.subf %19, %22 : vector<16x8xf32>
    %24 = math.exp %23 : vector<16x8xf32>
    %cst_15 = arith.constant dense<0.000000e+00> : vector<16xf32>
    %25 = vector.multi_reduction <add>, %24, %cst_15 [1] : vector<16x8xf32> to vector<16xf32>
    %26 = vector.shape_cast %25 : vector<16xf32> to vector<16x1xf32>
    %27 = tpu.reciprocal %26 : vector<16x1xf32> -> vector<16x1xf32>
    %28 = vector.broadcast %27 : vector<16x1xf32> to vector<16x8xf32>
    %29 = arith.mulf %24, %28 : vector<16x8xf32>
    %30 = vector.shape_cast %29 : vector<16x8xf32> to vector<16x8x1xf32>
    %31 = vector.shape_cast %30 : vector<16x8x1xf32> to vector<128x1xf32>
    %32 = vector.broadcast %31 : vector<128x1xf32> to vector<128x32xf32>
    %33 = arith.mulf %0, %32 : vector<128x32xf32>
    %34 = vector.shape_cast %33 : vector<128x32xf32> to vector<16x8x32xf32>
    %cst_16 = arith.constant dense<0.000000e+00> : vector<16x32xf32>
    %35 = vector.multi_reduction <add>, %34, %cst_16 [1] : vector<16x8x32xf32> to vector<16x32xf32>
    %c0_17 = arith.constant 0 : index
    %c0_18 = arith.constant 0 : index
    %36 = vector.load %arg7[%c0_17, %c0_18] : memref<16x32xf32, #tpu.memory_space<vmem>>, vector<16x32xf32>
    tpu.vector_store %arg7[%c0_17, %c0_18], %35 {strides = array<i32>} : memref<16x32xf32, #tpu.memory_space<vmem>>, vector<16x32xf32>,
    %c0_19 = arith.constant 0 : index
    %c0_20 = arith.constant 0 : index
    %37 = vector.load %arg8[%c0_19, %c0_20] : memref<16x8xf32, #tpu.memory_space<vmem>>, vector<16x8xf32>
    tpu.vector_store %arg8[%c0_19, %c0_20], %29 {strides = array<i32>} : memref<16x8xf32, #tpu.memory_space<vmem>>, vector<16x8xf32>,
    return
  }
  func.func @transform_0(%arg0: i32) -> (i32, i32) {
    %c0_i32 = arith.constant 0 : i32
    %c0_i32_0 = arith.constant 0 : i32
    return %arg0, %c0_i32 : i32, i32
  }
  func.func @transform_1(%arg0: i32) -> (i32, i32) {
    %c0_i32 = arith.constant 0 : i32
    %c0_i32_0 = arith.constant 0 : i32
    return %arg0, %c0_i32 : i32, i32
  }
  func.func @transform_2(%arg0: i32) -> (i32, i32) {
    %c0_i32 = arith.constant 0 : i32
    %c0_i32_0 = arith.constant 0 : i32
    %c0_i32_1 = arith.constant 0 : i32
    return %c0_i32, %c0_i32_0 : i32, i32
  }
  func.func @transform_3(%arg0: i32) -> (i32, i32) {
    %c0_i32 = arith.constant 0 : i32
    %c0_i32_0 = arith.constant 0 : i32
    %c0_i32_1 = arith.constant 0 : i32
    return %c0_i32, %c0_i32_0 : i32, i32
  }
  func.func @transform_4(%arg0: i32) -> (i32, i32) {
    %c0_i32 = arith.constant 0 : i32
    %c0_i32_0 = arith.constant 0 : i32
    %c0_i32_1 = arith.constant 0 : i32
    return %c0_i32, %c0_i32_0 : i32, i32
  }
  func.func @transform_5(%arg0: i32) -> (i32, i32) {
    %c0_i32 = arith.constant 0 : i32
    %c0_i32_0 = arith.constant 0 : i32
    %c0_i32_1 = arith.constant 0 : i32
    return %c0_i32, %c0_i32_0 : i32, i32
  }
  func.func @transform_6(%arg0: i32) -> (i32, i32) {
    %c0_i32 = arith.constant 0 : i32
    %c0_i32_0 = arith.constant 0 : i32
    return %arg0, %c0_i32 : i32, i32
  }
  func.func @transform_7(%arg0: i32) -> (i32, i32) {
    %c0_i32 = arith.constant 0 : i32
    %c0_i32_0 = arith.constant 0 : i32
    return %arg0, %c0_i32 : i32, i32
  }
}

</mosaic_0001>

<llo_original>
// kernel: tpu_custom_call.1
$region0: #{tpu_custom_call.1}
  #allocation0 [shape = 'u32[]', space=smem, size = 0x4, offset = 0x4, fixed_abs, tag = 'smem constant byte address 0x4 - core index']
  #allocation1 [shape = 'u32[144,128]{1,0:T(1,128)}', space=vmem, size = 0x12000, scoped, tag = 'internal scratch']
  %s0 = inlined_call_operand.vmem [shape: f32[256,32], index: 0, kind: input, shape index: {}]
  %s1 = inlined_call_operand.vmem [shape: f32[32,16], index: 1, kind: input, shape index: {}]
  %s2 = inlined_call_operand.vmem [shape: f32[32,32], index: 2, kind: input, shape index: {}]
  %s3 = inlined_call_operand.vmem [shape: f32[16,32], index: 3, kind: input, shape index: {}]
  %s4 = inlined_call_operand.vmem [shape: f32[1,32], index: 4, kind: input, shape index: {}]
  %s5 = inlined_call_operand.vmem [shape: f32[1,32], index: 5, kind: input, shape index: {}]
  %s6 = inlined_call_operand.hbm [shape: f32[32,32], index: 6, kind: output, shape index: {0}]
  %s7 = inlined_call_operand.vmem [shape: f32[32,8], index: 7, kind: output, shape index: {1}]
  %8 = xla_tuple %s6, %s7
  %s9 = sld [smem:[#allocation0]]
  $region65: #{tpu_custom_call.1} parent=0
    _
  %s11 = ssub.s32 1, %s9
  %s12 = scalar_select 0, %s11, %s9
  $region1: #{tpu_custom_call.1} parent=0
    #allocation2 [shape = 'u8[16384]{0}', space=vmem, size = 0x4000, scoped, tag = 'output window, operand 0']
    #allocation3 [shape = 's32[2]{0}', space=sflag, size = 0x8, scoped, tag = 'scoped memory for tpu_custom_call.1']
    %13 = vsyncpa [#allocation3], 0
    %s14 = scalar_lea.sflag [#allocation3], 1
    %15 = vsyncpa %s14, 0
    loop: start=0, step=1, limit=4
    $region2: #{tpu_custom_call.1} parent=1 // loop_pre_header
      _
    $region3: #{tpu_custom_call.1} parent=1 // loop_header
      %s17 = sphi 0, %s21
      %p18 = scmp.ge.s32.totalorder %s17, 4
      %s27 = sphi 0, %s29
      %s30 = sphi 0, %s27
      %s31 = sphi 0, %s30
      %s47 = sphi 0, %s31
      %s53 = sphi 0, %s55
      %s56 = sphi 0, %s53
      %s57 = sphi 0, %s56
      %s73 = sphi 0, %s57
      %s77 = sphi 0, %s77
      %s79 = sphi 0, %s77
      %s80 = sphi 0, %s79
      %s94 = sphi 0, %s80
      %s98 = sphi 0, %s98
      %s100 = sphi 0, %s98
      %s101 = sphi 0, %s100
      %s115 = sphi 0, %s101
      %s119 = sphi 0, %s119
      %s121 = sphi 0, %s119
      %s122 = sphi 0, %s121
      %s136 = sphi 0, %s122
      %s140 = sphi 0, %s140
      %s142 = sphi 0, %s140
      %s143 = sphi 0, %s142
      %s157 = sphi 0, %s143
      %s163 = sphi 0, %s165
      %s166 = sphi 0, %s163
      %s167 = sphi 0, %s166
      %s183 = sphi 0, %s167
      %s189 = sphi 0, %s191
      %s192 = sphi 0, %s189
      %s193 = sphi 0, %s192
      %s209 = sphi 0, %s193
    $region4: #{tpu_custom_call.1} parent=1 // loop_header_branch
      %20 = sbr.rel (%p18) target = $region8
    $region5: #{tpu_custom_call.1} parent=1 // loop_body
      %s22 = ssub.s32 %s17, 1
      %s23 = ssub.s32 %s17, 2
      %s24 = sadd.s32 %s17, 1
      %s25 = ssub.s32 %s17, %s24
      %p26 = scmp.eq.s32.totalorder %s25, 0
      %s28 = sadd.s32 %s27, 1
      %s29 = scalar_select %p26, %s27, %s28
      %p32 = pneg %p26
      %p33 = scmp.eq.s32.totalorder %s17, 1
      %p34 = por %p32, %p33
      %p35 = scmp.ne.s32.totalorder %s27, %s30
      %p36 = scmp.eq.s32.totalorder %s17, 0
      %p37 = por %p35, %p36
      %p38 = scmp.ne.s32.totalorder %s27, %s30
      %p39 = scmp.eq.s32.totalorder %s22, 1
      %p40 = por %p38, %p39
      %p41 = scmp.ne.s32.totalorder %s30, %s31
      %p42 = scmp.eq.s32.totalorder %s22, 0
      %p43 = por %p41, %p42
      %p44 = scmp.ne.s32.totalorder %s30, %s31
      %p45 = scmp.eq.s32.totalorder %s23, 1
      %p46 = por %p44, %p45
      %p48 = scmp.ne.s32.totalorder %s31, %s47
      %p49 = scmp.eq.s32.totalorder %s23, 0
      %p50 = por %p48, %p49
      %s51 = ssub.s32 %s17, %s24
      %p52 = scmp.eq.s32.totalorder %s51, 0
      %s54 = sadd.s32 %s53, 1
      %s55 = scalar_select %p52, %s53, %s54
      %p58 = pneg %p52
      %p59 = scmp.eq.s32.totalorder %s17, 1
      %p60 = por %p58, %p59
      %p61 = scmp.ne.s32.totalorder %s53, %s56
      %p62 = scmp.eq.s32.totalorder %s17, 0
      %p63 = por %p61, %p62
      %p64 = scmp.ne.s32.totalorder %s53, %s56
      %p65 = scmp.eq.s32.totalorder %s22, 1
      %p66 = por %p64, %p65
      %p67 = scmp.ne.s32.totalorder %s56, %s57
      %p68 = scmp.eq.s32.totalorder %s22, 0
      %p69 = por %p67, %p68
      %p70 = scmp.ne.s32.totalorder %s56, %s57
      %p71 = scmp.eq.s32.totalorder %s23, 1
      %p72 = por %p70, %p71
      %p74 = scmp.ne.s32.totalorder %s57, %s73
      %p75 = scmp.eq.s32.totalorder %s23, 0
      %p76 = por %p74, %p75
      %s78 = sadd.s32 %s77, 1
      %p81 = scmp.eq.s32.totalorder %s17, 1
      %p82 = scmp.ne.s32.totalorder %s77, %s79
      %p83 = scmp.eq.s32.totalorder %s17, 0
      %p84 = por %p82, %p83
      %p85 = scmp.ne.s32.totalorder %s77, %s79
      %p86 = scmp.eq.s32.totalorder %s22, 1
      %p87 = por %p85, %p86
      %p88 = scmp.ne.s32.totalorder %s79, %s80
      %p89 = scmp.eq.s32.totalorder %s22, 0
      %p90 = por %p88, %p89
      %p91 = scmp.ne.s32.totalorder %s79, %s80
      %p92 = scmp.eq.s32.totalorder %s23, 1
      %p93 = por %p91, %p92
      %p95 = scmp.ne.s32.totalorder %s80, %s94
      %p96 = scmp.eq.s32.totalorder %s23, 0
      %p97 = por %p95, %p96
      %s99 = sadd.s32 %s98, 1
      %p102 = scmp.eq.s32.totalorder %s17, 1
      %p103 = scmp.ne.s32.totalorder %s98, %s100
      %p104 = scmp.eq.s32.totalorder %s17, 0
      %p105 = por %p103, %p104
      %p106 = scmp.ne.s32.totalorder %s98, %s100
      %p107 = scmp.eq.s32.totalorder %s22, 1
      %p108 = por %p106, %p107
      %p109 = scmp.ne.s32.totalorder %s100, %s101
      %p110 = scmp.eq.s32.totalorder %s22, 0
      %p111 = por %p109, %p110
      %p112 = scmp.ne.s32.totalorder %s100, %s101
      %p113 = scmp.eq.s32.totalorder %s23, 1
      %p114 = por %p112, %p113
      %p116 = scmp.ne.s32.totalorder %s101, %s115
      %p117 = scmp.eq.s32.totalorder %s23, 0
      %p118 = por %p116, %p117
      %s120 = sadd.s32 %s119, 1
      %p123 = scmp.eq.s32.totalorder %s17, 1
      %p124 = scmp.ne.s32.totalorder %s119, %s121
      %p125 = scmp.eq.s32.totalorder %s17, 0
      %p126 = por %p124, %p125
      %p127 = scmp.ne.s32.totalorder %s119, %s121
      %p128 = scmp.eq.s32.totalorder %s22, 1
      %p129 = por %p127, %p128
      %p130 = scmp.ne.s32.totalorder %s121, %s122
      %p131 = scmp.eq.s32.totalorder %s22, 0
      %p132 = por %p130, %p131
      %p133 = scmp.ne.s32.totalorder %s121, %s122
      %p134 = scmp.eq.s32.totalorder %s23, 1
      %p135 = por %p133, %p134
      %p137 = scmp.ne.s32.totalorder %s122, %s136
      %p138 = scmp.eq.s32.totalorder %s23, 0
      %p139 = por %p137, %p138
      %s141 = sadd.s32 %s140, 1
      %p144 = scmp.eq.s32.totalorder %s17, 1
      %p145 = scmp.ne.s32.totalorder %s140, %s142
      %p146 = scmp.eq.s32.totalorder %s17, 0
      %p147 = por %p145, %p146
      %p148 = scmp.ne.s32.totalorder %s140, %s142
      %p149 = scmp.eq.s32.totalorder %s22, 1
      %p150 = por %p148, %p149
      %p151 = scmp.ne.s32.totalorder %s142, %s143
      %p152 = scmp.eq.s32.totalorder %s22, 0
      %p153 = por %p151, %p152
      %p154 = scmp.ne.s32.totalorder %s142, %s143
      %p155 = scmp.eq.s32.totalorder %s23, 1
      %p156 = por %p154, %p155
      %p158 = scmp.ne.s32.totalorder %s143, %s157
      %p159 = scmp.eq.s32.totalorder %s23, 0
      %p160 = por %p158, %p159
      %s161 = ssub.s32 %s17, %s24
      %p162 = scmp.eq.s32.totalorder %s161, 0
      %s164 = sadd.s32 %s163, 1
      %s165 = scalar_select %p162, %s163, %s164
      %p168 = pneg %p162
      %p169 = scmp.eq.s32.totalorder %s17, 1
      %p170 = por %p168, %p169
      %p171 = scmp.ne.s32.totalorder %s163, %s166
      %p172 = scmp.eq.s32.totalorder %s17, 0
      %p173 = por %p171, %p172
      %p174 = scmp.ne.s32.totalorder %s163, %s166
      %p175 = scmp.eq.s32.totalorder %s22, 1
      %p176 = por %p174, %p175
      %p177 = scmp.ne.s32.totalorder %s166, %s167
      %p178 = scmp.eq.s32.totalorder %s22, 0
      %p179 = por %p177, %p178
      %p180 = scmp.ne.s32.totalorder %s166, %s167
      %p181 = scmp.eq.s32.totalorder %s23, 1
      %p182 = por %p180, %p181
      %p184 = scmp.ne.s32.totalorder %s167, %s183
      %p185 = scmp.eq.s32.totalorder %s23, 0
      %p186 = por %p184, %p185
      %s187 = ssub.s32 %s17, %s24
      %p188 = scmp.eq.s32.totalorder %s187, 0
      %s190 = sadd.s32 %s189, 1
      %s191 = scalar_select %p188, %s189, %s190
      %p194 = pneg %p188
      %p195 = scmp.eq.s32.totalorder %s17, 1
      %p196 = por %p194, %p195
      %p197 = scmp.ne.s32.totalorder %s189, %s192
      %p198 = scmp.eq.s32.totalorder %s17, 0
      %p199 = por %p197, %p198
      %p200 = scmp.ne.s32.totalorder %s189, %s192
      %p201 = scmp.eq.s32.totalorder %s22, 1
      %p202 = por %p200, %p201
      %p203 = scmp.ne.s32.totalorder %s192, %s193
      %p204 = scmp.eq.s32.totalorder %s22, 0
      %p205 = por %p203, %p204
      %p206 = scmp.ne.s32.totalorder %s192, %s193
      %p207 = scmp.eq.s32.totalorder %s23, 1
      %p208 = por %p206, %p207
      %p210 = scmp.ne.s32.totalorder %s193, %s209
      %p211 = scmp.eq.s32.totalorder %s23, 0
      %p212 = por %p210, %p211
      %p213 = scmp.le.s32.totalorder 1, %s17
      %p214 = scmp.lt.s32.totalorder %s17, 3
      %p215 = pnand %p213, %p214
      %p216 = pneg %p215
      // Predicated region
      $region9: #{tpu_custom_call.1} parent=5 // pred_check
        _
      $region10: #{tpu_custom_call.1} parent=5 // pred_check_branch
        %218 = sbr.rel (%p215) target = $region12
      $region11: #{tpu_custom_call.1} parent=5 // pred_region
        %s219 = ssub.s32 %s17, 1
        // Predicated region
        $region13: #{tpu_custom_call.1} parent=11 // pred_check
          %p220 = pneg %p90
        $region14: #{tpu_custom_call.1} parent=11 // pred_check_branch
          %222 = sbr.rel (%p220) target = $region16
        $region15: #{tpu_custom_call.1} parent=11 // pred_region
          _
        $region16: #{tpu_custom_call.1} parent=11 // pred_fallthru
          _
        // Predicated region
        $region17: #{tpu_custom_call.1} parent=11 // pred_check
          %p223 = pneg %p111
        $region18: #{tpu_custom_call.1} parent=11 // pred_check_branch
          %225 = sbr.rel (%p223) target = $region20
        $region19: #{tpu_custom_call.1} parent=11 // pred_region
          _
        $region20: #{tpu_custom_call.1} parent=11 // pred_fallthru
          _
        // Predicated region
        $region21: #{tpu_custom_call.1} parent=11 // pred_check
          %p226 = pneg %p132
        $region22: #{tpu_custom_call.1} parent=11 // pred_check_branch
          %228 = sbr.rel (%p226) target = $region24
        $region23: #{tpu_custom_call.1} parent=11 // pred_region
          _
        $region24: #{tpu_custom_call.1} parent=11 // pred_fallthru
          _
        // Predicated region
        $region25: #{tpu_custom_call.1} parent=11 // pred_check
          %p229 = pneg %p153
        $region26: #{tpu_custom_call.1} parent=11 // pred_check_branch
          %231 = sbr.rel (%p229) target = $region28
        $region27: #{tpu_custom_call.1} parent=11 // pred_region
          _
        $region28: #{tpu_custom_call.1} parent=11 // pred_fallthru
          _
      $region12: #{tpu_custom_call.1} parent=5 // pred_fallthru
        _
      %p232 = scmp.lt.s32.totalorder %s17, 2
      // Predicated region
      $region29: #{tpu_custom_call.1} parent=5 // pred_check
        %p233 = pneg %p232
      $region30: #{tpu_custom_call.1} parent=5 // pred_check_branch
        %235 = sbr.rel (%p233) target = $region32
      $region31: #{tpu_custom_call.1} parent=5 // pred_region
        // Predicated region
        $region33: #{tpu_custom_call.1} parent=31 // pred_check
          %p236 = pneg %p37
        $region34: #{tpu_custom_call.1} parent=31 // pred_check_branch
          %238 = sbr.rel (%p236) target = $region36
        $region35: #{tpu_custom_call.1} parent=31 // pred_region
          %s239 = smul.u32 16, %s17
          %p240 = scmp.lt.s32.totalorder %s239, 31
          %s241 = scalar_select %p240, %s239, 31
          %s242 = smul.addr %s241, 8
          %s243 = scalar_lea.vmem %s0, %s242
          %s244 = smul.u32 16, %s17
        $region36: #{tpu_custom_call.1} parent=31 // pred_fallthru
          _
        // Predicated region
        $region37: #{tpu_custom_call.1} parent=31 // pred_check
          %p245 = pneg %p63
        $region38: #{tpu_custom_call.1} parent=31 // pred_check_branch
          %247 = sbr.rel (%p245) target = $region40
        $region39: #{tpu_custom_call.1} parent=31 // pred_region
          %s248 = smul.u32 2, %s17
          %p249 = scmp.lt.s32.totalorder %s248, 3
          %s250 = scalar_select %p249, %s248, 3
          %s251 = smul.addr %s250, 8
          %s252 = scalar_lea.vmem %s1, %s251
          %s253 = smul.u32 2, %s17
        $region40: #{tpu_custom_call.1} parent=31 // pred_fallthru
          _
      $region32: #{tpu_custom_call.1} parent=5 // pred_fallthru
        _
      %p254 = scmp.le.s32.totalorder 1, %s17
      %p255 = scmp.lt.s32.totalorder %s17, 3
      %p256 = pnand %p254, %p255
      %p257 = pneg %p256
      // Predicated region
      $region41: #{tpu_custom_call.1} parent=5 // pred_check
        _
      $region42: #{tpu_custom_call.1} parent=5 // pred_check_branch
        %259 = sbr.rel (%p256) target = $region44
      $region43: #{tpu_custom_call.1} parent=5 // pred_region
        %s260 = ssub.s32 %s17, 1
        %s261 = smul.u32 16, %s22
        %p262 = scmp.lt.s32.totalorder %s261, 31
        %s263 = scalar_select %p262, %s261, 31
        %s264 = smul.addr %s263, 8
        %s265 = scalar_lea.vmem %s0, %s264
        %p266 = pneg %p43
        %p267 = pneg %p40
        %s268 = smul.u32 2, %s22
        %p269 = scmp.lt.s32.totalorder %s268, 3
        %s270 = scalar_select %p269, %s268, 3
        %s271 = smul.addr %s270, 8
        %s272 = scalar_lea.vmem %s1, %s271
        %p273 = pneg %p69
        %p274 = pneg %p66
        %p275 = pneg %p90
        %p276 = pneg %p87
        %p277 = pneg %p111
        %p278 = pneg %p108
        %p279 = pneg %p132
        %p280 = pneg %p129
        %p281 = pneg %p153
        %p282 = pneg %p150
        %p283 = pneg %p179
        %p284 = pneg %p176
        %s285 = sand.u32 %s166, 1
        %s286 = scalar_lea.sflag [#allocation3], %s285
        %s287 = sand.u32 %s166, 1
        %s288 = smul.addr %s287, 16
        %s289 = scalar_lea.vmem [#allocation2], %s288
        %p290 = pneg %p205
        %p291 = pneg %p202
        %s292 = smul.u32 2, %s22
        %p293 = scmp.lt.s32.totalorder %s292, 3
        %s294 = scalar_select %p293, %s292, 3
        %s295 = smul.addr %s294, 8
        %s296 = scalar_lea.vmem %s7, %s295
        %s297 = smul.u32 16, %s22
        %p298 = scmp.lt.s32.totalorder %s297, 31
        %s299 = scalar_select %p298, %s297, 31
        %s300 = smul.addr %s299, 8
        %s301 = scalar_lea.vmem %s0, %s300
        %s302 = smul.u32 16, %s22
        %s303 = smul.u32 2, %s22
        %p304 = scmp.lt.s32.totalorder %s303, 3
        %s305 = scalar_select %p304, %s303, 3
        %s306 = smul.addr %s305, 8
        %s307 = scalar_lea.vmem %s1, %s306
        %s308 = smul.u32 2, %s22
        %s309 = smul.u32 2, %s22
        %s310 = smul.u32 2, %s22
        %p311 = scmp.lt.s32.totalorder %s310, 3
        %s312 = scalar_select %p311, %s310, 3
        %s313 = smul.addr %s312, 8
        %s314 = scalar_lea.vmem %s7, %s313
        %s315 = smul.u32 2, %s22
        %v316 = vld [vmem:[%s301] sm:$0xff]
        %v317 = vld [vmem:[%s301 + $0x8] sm:$0xff]
        %v318 = vld [vmem:[%s301 + $0x10] sm:$0xff]
        %v319 = vld [vmem:[%s301 + $0x18] sm:$0xff]
        %v320 = vld [vmem:[%s301 + $0x20] sm:$0xff]
        %v321 = vld [vmem:[%s301 + $0x28] sm:$0xff]
        %v322 = vld [vmem:[%s301 + $0x30] sm:$0xff]
        %v323 = vld [vmem:[%s301 + $0x38] sm:$0xff]
        %v324 = vld [vmem:[%s301 + $0x40] sm:$0xff]
        %v325 = vld [vmem:[%s301 + $0x48] sm:$0xff]
        %v326 = vld [vmem:[%s301 + $0x50] sm:$0xff]
        %v327 = vld [vmem:[%s301 + $0x58] sm:$0xff]
        %v328 = vld [vmem:[%s301 + $0x60] sm:$0xff]
        %v329 = vld [vmem:[%s301 + $0x68] sm:$0xff]
        %v330 = vld [vmem:[%s301 + $0x70] sm:$0xff]
        %v331 = vld [vmem:[%s301 + $0x78] sm:$0xff]
        %v332 = vld [vmem:[%s2] sm:$0xff]
        %v333 = vld [vmem:[%s2 + $0x8] sm:$0xff]
        %v334 = vld [vmem:[%s2 + $0x10] sm:$0xff]
        %v335 = vld [vmem:[%s2 + $0x18] sm:$0xff]
        %vm336 = vcmask 261120
        %v338 = vsel %vm336, %v316, 0
        %v341 = vsel %vm336, %v317, 0
        %v344 = vsel %vm336, %v318, 0
        %v347 = vsel %vm336, %v319, 0
        %v350 = vsel %vm336, %v320, 0
        %v353 = vsel %vm336, %v321, 0
        %v356 = vsel %vm336, %v322, 0
        %v359 = vsel %vm336, %v323, 0
        %v362 = vsel %vm336, %v324, 0
        %v365 = vsel %vm336, %v325, 0
        %v368 = vsel %vm336, %v326, 0
        %v371 = vsel %vm336, %v327, 0
        %v374 = vsel %vm336, %v328, 0
        %v377 = vsel %vm336, %v329, 0
        %v380 = vsel %vm336, %v330, 0
        %v383 = vsel %vm336, %v331, 0
        %385 = vmatprep.subr.mxu0 0.0
        %386 = vmatpush1.msra.mxu0 0.0
        %387 = vmatprep.subr.mxu0 0.0
        %388 = vmatpush1.msra.mxu0 0.0
        %389 = vmatprep.subr.mxu0 0.0
        %390 = vmatpush1.msra.mxu0 0.0
        %391 = vmatprep.subr.mxu0 0.0
        %392 = vmatpush1.msra.mxu0 0.0
        %393 = vmatprep.subr.mxu0 0.0
        %394 = vmatpush1.msra.mxu0 0.0
        %395 = vmatprep.subr.mxu0 0.0
        %396 = vmatpush1.msra.mxu0 0.0
        %397 = vmatprep.subr.mxu0 0.0
        %398 = vmatpush1.msra.mxu0 0.0
        %399 = vmatprep.subr.mxu0 0.0
        %400 = vmatpush1.msra.mxu0 0.0
        %401 = vmatprep.subr.mxu0 0.0
        %402 = vmatpush1.msra.mxu0 0.0
        %403 = vmatprep.subr.mxu0 0.0
        %404 = vmatpush1.msra.mxu0 0.0
        %405 = vmatprep.subr.mxu0 0.0
        %406 = vmatpush1.msra.mxu0 0.0
        %407 = vmatprep.subr.mxu0 0.0
        %408 = vmatpush1.msra.mxu0 0.0
        %409 = vmatprep.subr.mxu0 0.0
        %410 = vmatpush1.msra.mxu0 %v335
        %411 = vmatprep.subr.mxu0 0.0
        %412 = vmatpush1.msra.mxu0 %v334
        %413 = vmatprep.subr.mxu0 0.0
        %414 = vmatpush1.msra.mxu0 %v333
        %415 = vmatprep.subr.mxu0 0.0
        %416 = vmatpush1.msra.mxu0 %v332
        %417 = vmatprep.subr.mxu0 0.0
        %418 = vmatpush2.msra.mxu0 0.0
        %419 = vmatprep.subr.mxu0 0.0
        %420 = vmatpush2.msra.mxu0 0.0
        %421 = vmatprep.subr.mxu0 0.0
        %422 = vmatpush2.msra.mxu0 0.0
        %423 = vmatprep.subr.mxu0 0.0
        %424 = vmatpush2.msra.mxu0 0.0
        %425 = vmatprep.subr.mxu0 0.0
        %426 = vmatpush2.msra.mxu0 0.0
        %427 = vmatprep.subr.mxu0 0.0
        %428 = vmatpush2.msra.mxu0 0.0
        %429 = vmatprep.subr.mxu0 0.0
        %430 = vmatpush2.msra.mxu0 0.0
        %431 = vmatprep.subr.mxu0 0.0
        %432 = vmatpush2.msra.mxu0 0.0
        %433 = vmatprep.subr.mxu0 0.0
        %434 = vmatpush2.msra.mxu0 0.0
        %435 = vmatprep.subr.mxu0 0.0
        %436 = vmatpush2.msra.mxu0 0.0
        %437 = vmatprep.subr.mxu0 0.0
        %438 = vmatpush2.msra.mxu0 0.0
        %439 = vmatprep.subr.mxu0 0.0
        %440 = vmatpush2.msra.mxu0 0.0
        %441 = vmatprep.subr.mxu0 0.0
        %442 = vmatpush2.msra.mxu0 0.0
        %443 = vmatprep.subr.mxu0 0.0
        %444 = vmatpush2.msra.mxu0 0.0
        %445 = vmatprep.subr.mxu0 0.0
        %446 = vmatpush2.msra.mxu0 0.0
        %447 = vmatprep.subr.mxu0 0.0
        %448 = vmatpush2.msra.mxu0 0.0
        %449 = vmatprep.mubr.f32.mxu0 0.0
        %450 = vmatmul.mubr.f32.gmra.mxu0 %v338
        %v451 = vpop.f32.mrf.mxu0
        %v452 = vadd.f32 0.0, %v451
        %v453 = vpop.f32.mrf.mxu0
        %454 = vmatprep.mubr.f32.mxu0 0.0
        %455 = vmatmul.mubr.f32.gmra.mxu0 %v341
        %v456 = vpop.f32.mrf.mxu0
        %v457 = vadd.f32 0.0, %v456
        %v458 = vpop.f32.mrf.mxu0
        %459 = vmatprep.mubr.f32.mxu0 0.0
        %460 = vmatmul.mubr.f32.gmra.mxu0 %v344
        %v461 = vpop.f32.mrf.mxu0
        %v462 = vadd.f32 0.0, %v461
        %v463 = vpop.f32.mrf.mxu0
        %464 = vmatprep.mubr.f32.mxu0 0.0
        %465 = vmatmul.mubr.f32.gmra.mxu0 %v347
        %v466 = vpop.f32.mrf.mxu0
        %v467 = vadd.f32 0.0, %v466
        %v468 = vpop.f32.mrf.mxu0
        %469 = vmatprep.mubr.f32.mxu0 0.0
        %470 = vmatmul.mubr.f32.gmra.mxu0 %v350
        %v471 = vpop.f32.mrf.mxu0
        %v472 = vadd.f32 0.0, %v471
        %v473 = vpop.f32.mrf.mxu0
        %474 = vmatprep.mubr.f32.mxu0 0.0
        %475 = vmatmul.mubr.f32.gmra.mxu0 %v353
        %v476 = vpop.f32.mrf.mxu0
        %v477 = vadd.f32 0.0, %v476
        %v478 = vpop.f32.mrf.mxu0
        %479 = vmatprep.mubr.f32.mxu0 0.0
        %480 = vmatmul.mubr.f32.gmra.mxu0 %v356
        %v481 = vpop.f32.mrf.mxu0
        %v482 = vadd.f32 0.0, %v481
        %v483 = vpop.f32.mrf.mxu0
        %484 = vmatprep.mubr.f32.mxu0 0.0
        %485 = vmatmul.mubr.f32.gmra.mxu0 %v359
        %v486 = vpop.f32.mrf.mxu0
        %v487 = vadd.f32 0.0, %v486
        %v488 = vpop.f32.mrf.mxu0
        %489 = vmatprep.mubr.f32.mxu0 0.0
        %490 = vmatmul.mubr.f32.gmra.mxu0 %v362
        %v491 = vpop.f32.mrf.mxu0
        %v492 = vadd.f32 0.0, %v491
        %v493 = vpop.f32.mrf.mxu0
        %494 = vmatprep.mubr.f32.mxu0 0.0
        %495 = vmatmul.mubr.f32.gmra.mxu0 %v365
        %v496 = vpop.f32.mrf.mxu0
        %v497 = vadd.f32 0.0, %v496
        %v498 = vpop.f32.mrf.mxu0
        %499 = vmatprep.mubr.f32.mxu0 0.0
        %500 = vmatmul.mubr.f32.gmra.mxu0 %v368
        %v501 = vpop.f32.mrf.mxu0
        %v502 = vadd.f32 0.0, %v501
        %v503 = vpop.f32.mrf.mxu0
        %504 = vmatprep.mubr.f32.mxu0 0.0
        %505 = vmatmul.mubr.f32.gmra.mxu0 %v371
        %v506 = vpop.f32.mrf.mxu0
        %v507 = vadd.f32 0.0, %v506
        %v508 = vpop.f32.mrf.mxu0
        %509 = vmatprep.mubr.f32.mxu0 0.0
        %510 = vmatmul.mubr.f32.gmra.mxu0 %v374
        %v511 = vpop.f32.mrf.mxu0
        %v512 = vadd.f32 0.0, %v511
        %v513 = vpop.f32.mrf.mxu0
        %514 = vmatprep.mubr.f32.mxu0 0.0
        %515 = vmatmul.mubr.f32.gmra.mxu0 %v377
        %v516 = vpop.f32.mrf.mxu0
        %v517 = vadd.f32 0.0, %v516
        %v518 = vpop.f32.mrf.mxu0
        %519 = vmatprep.mubr.f32.mxu0 0.0
        %520 = vmatmul.mubr.f32.gmra.mxu0 %v380
        %v521 = vpop.f32.mrf.mxu0
        %v522 = vadd.f32 0.0, %v521
        %v523 = vpop.f32.mrf.mxu0
        %524 = vmatprep.mubr.f32.mxu0 0.0
        %525 = vmatmul.mubr.f32.gmra.mxu0 %v383
        %v526 = vpop.f32.mrf.mxu0
        %v527 = vadd.f32 0.0, %v526
        %v528 = vpop.f32.mrf.mxu0
        %529 = vdwg.mxu0
        %v530 = vld [vmem:[%s307] sm:$0xff]
        %v531 = vld [vmem:[%s307 + $0x8] sm:$0xff]
        %v532 = vld [vmem:[%s3] sm:$0xff]
        %v533 = vld [vmem:[%s3 + $0x8] sm:$0xff]
        %v534 = vld [vmem:[%s4] sm:$0x1]
        %v536 = vlaneseq
        %v537 = vshrl.u32 %v536, 7
        %v538 = vsub.s32 0, %v537
        %v539 = vrot.slane %v534, %v538
        %vm541 = vcmask 130048
        %v543 = vsel %vm541, %v530, 0
        %v546 = vsel %vm541, %v531, 0
        %548 = vmatprep.subr.mxu0 0.0
        %549 = vmatpush1.msra.mxu0 0.0
        %550 = vmatprep.subr.mxu0 0.0
        %551 = vmatpush1.msra.mxu0 0.0
        %552 = vmatprep.subr.mxu0 0.0
        %553 = vmatpush1.msra.mxu0 0.0
        %554 = vmatprep.subr.mxu0 0.0
        %555 = vmatpush1.msra.mxu0 0.0
        %556 = vmatprep.subr.mxu0 0.0
        %557 = vmatpush1.msra.mxu0 0.0
        %558 = vmatprep.subr.mxu0 0.0
        %559 = vmatpush1.msra.mxu0 0.0
        %560 = vmatprep.subr.mxu0 0.0
        %561 = vmatpush1.msra.mxu0 0.0
        %562 = vmatprep.subr.mxu0 0.0
        %563 = vmatpush1.msra.mxu0 0.0
        %564 = vmatprep.subr.mxu0 0.0
        %565 = vmatpush1.msra.mxu0 0.0
        %566 = vmatprep.subr.mxu0 0.0
        %567 = vmatpush1.msra.mxu0 0.0
        %568 = vmatprep.subr.mxu0 0.0
        %569 = vmatpush1.msra.mxu0 0.0
        %570 = vmatprep.subr.mxu0 0.0
        %571 = vmatpush1.msra.mxu0 0.0
        %572 = vmatprep.subr.mxu0 0.0
        %573 = vmatpush1.msra.mxu0 0.0
        %574 = vmatprep.subr.mxu0 0.0
        %575 = vmatpush1.msra.mxu0 0.0
        %576 = vmatprep.subr.mxu0 0.0
        %577 = vmatpush1.msra.mxu0 %v533
        %578 = vmatprep.subr.mxu0 0.0
        %579 = vmatpush1.msra.mxu0 %v532
        %580 = vmatprep.subr.mxu0 0.0
        %581 = vmatpush2.msra.mxu0 0.0
        %582 = vmatprep.subr.mxu0 0.0
        %583 = vmatpush2.msra.mxu0 0.0
        %584 = vmatprep.subr.mxu0 0.0
        %585 = vmatpush2.msra.mxu0 0.0
        %586 = vmatprep.subr.mxu0 0.0
        %587 = vmatpush2.msra.mxu0 0.0
        %588 = vmatprep.subr.mxu0 0.0
        %589 = vmatpush2.msra.mxu0 0.0
        %590 = vmatprep.subr.mxu0 0.0
        %591 = vmatpush2.msra.mxu0 0.0
        %592 = vmatprep.subr.mxu0 0.0
        %593 = vmatpush2.msra.mxu0 0.0
        %594 = vmatprep.subr.mxu0 0.0
        %595 = vmatpush2.msra.mxu0 0.0
        %596 = vmatprep.subr.mxu0 0.0
        %597 = vmatpush2.msra.mxu0 0.0
        %598 = vmatprep.subr.mxu0 0.0
        %599 = vmatpush2.msra.mxu0 0.0
        %600 = vmatprep.subr.mxu0 0.0
        %601 = vmatpush2.msra.mxu0 0.0
        %602 = vmatprep.subr.mxu0 0.0
        %603 = vmatpush2.msra.mxu0 0.0
        %604 = vmatprep.subr.mxu0 0.0
        %605 = vmatpush2.msra.mxu0 0.0
        %606 = vmatprep.subr.mxu0 0.0
        %607 = vmatpush2.msra.mxu0 0.0
        %608 = vmatprep.subr.mxu0 0.0
        %609 = vmatpush2.msra.mxu0 0.0
        %610 = vmatprep.subr.mxu0 0.0
        %611 = vmatpush2.msra.mxu0 0.0
        %612 = vmatprep.mubr.f32.mxu0 0.0
        %613 = vmatmul.mubr.f32.gmra.mxu0 %v543
        %v614 = vpop.f32.mrf.mxu0
        %v615 = vadd.f32 %v539, %v614
        %v616 = vpop.f32.mrf.mxu0
        %617 = vmatprep.mubr.f32.mxu0 0.0
        %618 = vmatmul.mubr.f32.gmra.mxu0 %v546
        %v619 = vpop.f32.mrf.mxu0
        %v620 = vadd.f32 %v539, %v619
        %v621 = vpop.f32.mrf.mxu0
        %622 = vdwg.mxu0
        %v625 = vcombine.high %v615, %v615
        %v627 = vunpack.c.l.s4 1966171168
        %v628 = vunpack.c.0.s8 %v627
        %v629 = vlaneseq
        %v630 = vshrl.u32 %v629, 7
        %v631 = vsub.s32 %v628, %v630
        %v632 = vrot.slane %v615, %v631
        %v634 = vunpack.c.l.s4 1966171168
        %v635 = vunpack.c.0.s8 %v634
        %v636 = vlaneseq
        %v637 = vshrl.u32 %v636, 7
        %v638 = vsub.s32 %v635, %v637
        %v639 = vrot.slane %v625, %v638
        %v640 = vcombine.high %v632, %v632
        %v641 = vcombine.high %v639, %v639
        %v643 = vunpack.c.l.s4 1966171168
        %v644 = vunpack.c.0.s8 %v643
        %v645 = vlaneseq
        %v646 = vshrl.u32 %v645, 7
        %v647 = vsub.s32 %v644, %v646
        %v648 = vrot.slane %v632, %v647
        %v650 = vunpack.c.l.s4 1966171168
        %v651 = vunpack.c.0.s8 %v650
        %v652 = vlaneseq
        %v653 = vshrl.u32 %v652, 7
        %v654 = vsub.s32 %v651, %v653
        %v655 = vrot.slane %v639, %v654
        %v657 = vunpack.c.l.s4 1966171168
        %v658 = vunpack.c.0.s8 %v657
        %v659 = vlaneseq
        %v660 = vshrl.u32 %v659, 7
        %v661 = vsub.s32 %v658, %v660
        %v662 = vrot.slane %v640, %v661
        %v664 = vunpack.c.l.s4 1966171168
        %v665 = vunpack.c.0.s8 %v664
        %v666 = vlaneseq
        %v667 = vshrl.u32 %v666, 7
        %v668 = vsub.s32 %v665, %v667
        %v669 = vrot.slane %v641, %v668
        %v670 = vcombine.high %v648, %v648
        %v671 = vcombine.high %v655, %v655
        %v672 = vcombine.high %v662, %v662
        %v673 = vcombine.high %v669, %v669
        %v674 = vcombine.high %v620, %v620
        %v676 = vunpack.c.l.s4 1966171168
        %v677 = vunpack.c.0.s8 %v676
        %v678 = vlaneseq
        %v679 = vshrl.u32 %v678, 7
        %v680 = vsub.s32 %v677, %v679
        %v681 = vrot.slane %v620, %v680
        %v683 = vunpack.c.l.s4 1966171168
        %v684 = vunpack.c.0.s8 %v683
        %v685 = vlaneseq
        %v686 = vshrl.u32 %v685, 7
        %v687 = vsub.s32 %v684, %v686
        %v688 = vrot.slane %v674, %v687
        %v689 = vcombine.high %v681, %v681
        %v690 = vcombine.high %v688, %v688
        %v692 = vunpack.c.l.s4 1966171168
        %v693 = vunpack.c.0.s8 %v692
        %v694 = vlaneseq
        %v695 = vshrl.u32 %v694, 7
        %v696 = vsub.s32 %v693, %v695
        %v697 = vrot.slane %v681, %v696
        %v699 = vunpack.c.l.s4 1966171168
        %v700 = vunpack.c.0.s8 %v699
        %v701 = vlaneseq
        %v702 = vshrl.u32 %v701, 7
        %v703 = vsub.s32 %v700, %v702
        %v704 = vrot.slane %v688, %v703
        %v706 = vunpack.c.l.s4 1966171168
        %v707 = vunpack.c.0.s8 %v706
        %v708 = vlaneseq
        %v709 = vshrl.u32 %v708, 7
        %v710 = vsub.s32 %v707, %v709
        %v711 = vrot.slane %v689, %v710
        %v713 = vunpack.c.l.s4 1966171168
        %v714 = vunpack.c.0.s8 %v713
        %v715 = vlaneseq
        %v716 = vshrl.u32 %v715, 7
        %v717 = vsub.s32 %v714, %v716
        %v718 = vrot.slane %v690, %v717
        %v719 = vcombine.high %v697, %v697
        %v720 = vcombine.high %v704, %v704
        %v721 = vcombine.high %v711, %v711
        %v722 = vcombine.high %v718, %v718
        %v723 = vlaneseq
        %v724 = vshrl.u32 %v723, 7
        %v725 = vsub.s32 0, %v724
        %v726 = vrot.slane %v648, %v725
        %v727 = vlaneseq
        %v728 = vshrl.u32 %v727, 7
        %v729 = vsub.s32 0, %v728
        %v730 = vrot.slane %v662, %v729
        %v731 = vlaneseq
        %v732 = vshrl.u32 %v731, 7
        %v733 = vsub.s32 0, %v732
        %v734 = vrot.slane %v670, %v733
        %v735 = vlaneseq
        %v736 = vshrl.u32 %v735, 7
        %v737 = vsub.s32 0, %v736
        %v738 = vrot.slane %v672, %v737
        %v739 = vlaneseq
        %v740 = vshrl.u32 %v739, 7
        %v741 = vsub.s32 0, %v740
        %v742 = vrot.slane %v655, %v741
        %v743 = vlaneseq
        %v744 = vshrl.u32 %v743, 7
        %v745 = vsub.s32 0, %v744
        %v746 = vrot.slane %v669, %v745
        %v747 = vlaneseq
        %v748 = vshrl.u32 %v747, 7
        %v749 = vsub.s32 0, %v748
        %v750 = vrot.slane %v671, %v749
        %v751 = vlaneseq
        %v752 = vshrl.u32 %v751, 7
        %v753 = vsub.s32 0, %v752
        %v754 = vrot.slane %v673, %v753
        %v755 = vlaneseq
        %v756 = vshrl.u32 %v755, 7
        %v757 = vsub.s32 0, %v756
        %v758 = vrot.slane %v697, %v757
        %v759 = vlaneseq
        %v760 = vshrl.u32 %v759, 7
        %v761 = vsub.s32 0, %v760
        %v762 = vrot.slane %v711, %v761
        %v763 = vlaneseq
        %v764 = vshrl.u32 %v763, 7
        %v765 = vsub.s32 0, %v764
        %v766 = vrot.slane %v719, %v765
        %v767 = vlaneseq
        %v768 = vshrl.u32 %v767, 7
        %v769 = vsub.s32 0, %v768
        %v770 = vrot.slane %v721, %v769
        %v771 = vlaneseq
        %v772 = vshrl.u32 %v771, 7
        %v773 = vsub.s32 0, %v772
        %v774 = vrot.slane %v704, %v773
        %v775 = vlaneseq
        %v776 = vshrl.u32 %v775, 7
        %v777 = vsub.s32 0, %v776
        %v778 = vrot.slane %v718, %v777
        %v779 = vlaneseq
        %v780 = vshrl.u32 %v779, 7
        %v781 = vsub.s32 0, %v780
        %v782 = vrot.slane %v720, %v781
        %v783 = vlaneseq
        %v784 = vshrl.u32 %v783, 7
        %v785 = vsub.s32 0, %v784
        %v786 = vrot.slane %v722, %v785
        %v803 = vadd.f32 %v452, %v726
        %v804 = vadd.f32 %v457, %v730
        %v805 = vadd.f32 %v462, %v734
        %v806 = vadd.f32 %v467, %v738
        %v807 = vadd.f32 %v472, %v742
        %v808 = vadd.f32 %v477, %v746
        %v809 = vadd.f32 %v482, %v750
        %v810 = vadd.f32 %v487, %v754
        %v811 = vadd.f32 %v492, %v758
        %v812 = vadd.f32 %v497, %v762
        %v813 = vadd.f32 %v502, %v766
        %v814 = vadd.f32 %v507, %v770
        %v815 = vadd.f32 %v512, %v774
        %v816 = vadd.f32 %v517, %v778
        %v817 = vadd.f32 %v522, %v782
        %v818 = vadd.f32 %v527, %v786
        %v819 = vmax.f32 %v803, 0.0
        %v820 = vmax.f32 %v804, 0.0
        %v821 = vmax.f32 %v805, 0.0
        %v822 = vmax.f32 %v806, 0.0
        %v823 = vmax.f32 %v807, 0.0
        %v824 = vmax.f32 %v808, 0.0
        %v825 = vmax.f32 %v809, 0.0
        %v826 = vmax.f32 %v810, 0.0
        %v827 = vmax.f32 %v811, 0.0
        %v828 = vmax.f32 %v812, 0.0
        %v829 = vmax.f32 %v813, 0.0
        %v830 = vmax.f32 %v814, 0.0
        %v831 = vmax.f32 %v815, 0.0
        %v832 = vmax.f32 %v816, 0.0
        %v833 = vmax.f32 %v817, 0.0
        %v834 = vmax.f32 %v818, 0.0
        %v835 = vld [vmem:[%s5] sm:$0x1]
        %v837 = vlaneseq
        %v838 = vshrl.u32 %v837, 7
        %v839 = vsub.s32 0, %v838
        %v840 = vrot.slane %v835, %v839
        %v842 = vmul.f32 %v819, %v840
        %v843 = vmul.f32 %v820, %v840
        %v844 = vmul.f32 %v821, %v840
        %v845 = vmul.f32 %v822, %v840
        %v846 = vmul.f32 %v823, %v840
        %v847 = vmul.f32 %v824, %v840
        %v848 = vmul.f32 %v825, %v840
        %v849 = vmul.f32 %v826, %v840
        %v850 = vmul.f32 %v827, %v840
        %v851 = vmul.f32 %v828, %v840
        %v852 = vmul.f32 %v829, %v840
        %v853 = vmul.f32 %v830, %v840
        %v854 = vmul.f32 %v831, %v840
        %v855 = vmul.f32 %v832, %v840
        %v856 = vmul.f32 %v833, %v840
        %v857 = vmul.f32 %v834, %v840
        %v858 = vsel %vm336, %v842, 0.0
        %859 = vadd.xlane.f32.xlu0 %v858
        %v860 = vpop.xlane.xlu0 %859
        %v861 = vsel %vm336, %v843, 0.0
        %862 = vadd.xlane.f32.xlu0 %v861
        %v863 = vpop.xlane.xlu0 %862
        %v864 = vsel %vm336, %v844, 0.0
        %865 = vadd.xlane.f32.xlu0 %v864
        %v866 = vpop.xlane.xlu0 %865
        %v867 = vsel %vm336, %v845, 0.0
        %868 = vadd.xlane.f32.xlu0 %v867
        %v869 = vpop.xlane.xlu0 %868
        %v870 = vsel %vm336, %v846, 0.0
        %871 = vadd.xlane.f32.xlu0 %v870
        %v872 = vpop.xlane.xlu0 %871
        %v873 = vsel %vm336, %v847, 0.0
        %874 = vadd.xlane.f32.xlu0 %v873
        %v875 = vpop.xlane.xlu0 %874
        %v876 = vsel %vm336, %v848, 0.0
        %877 = vadd.xlane.f32.xlu0 %v876
        %v878 = vpop.xlane.xlu0 %877
        %v879 = vsel %vm336, %v849, 0.0
        %880 = vadd.xlane.f32.xlu0 %v879
        %v881 = vpop.xlane.xlu0 %880
        %v882 = vsel %vm336, %v850, 0.0
        %883 = vadd.xlane.f32.xlu0 %v882
        %v884 = vpop.xlane.xlu0 %883
        %v885 = vsel %vm336, %v851, 0.0
        %886 = vadd.xlane.f32.xlu0 %v885
        %v887 = vpop.xlane.xlu0 %886
        %v888 = vsel %vm336, %v852, 0.0
        %889 = vadd.xlane.f32.xlu0 %v888
        %v890 = vpop.xlane.xlu0 %889
        %v891 = vsel %vm336, %v853, 0.0
        %892 = vadd.xlane.f32.xlu0 %v891
        %v893 = vpop.xlane.xlu0 %892
        %v894 = vsel %vm336, %v854, 0.0
        %895 = vadd.xlane.f32.xlu0 %v894
        %v896 = vpop.xlane.xlu0 %895
        %v897 = vsel %vm336, %v855, 0.0
        %898 = vadd.xlane.f32.xlu0 %v897
        %v899 = vpop.xlane.xlu0 %898
        %v900 = vsel %vm336, %v856, 0.0
        %901 = vadd.xlane.f32.xlu0 %v900
        %v902 = vpop.xlane.xlu0 %901
        %v903 = vsel %vm336, %v857, 0.0
        %904 = vadd.xlane.f32.xlu0 %v903
        %v905 = vpop.xlane.xlu0 %904
        %v922 = vlaneseq
        %v923 = vand.u32 %v922, 127
        %v924 = vlaneseq
        %v925 = vshrl.u32 %v924, 7
        %v926 = vsub.s32 %v923, %v925
        %v927 = vrot.slane %v860, %v926
        %v928 = vlaneseq
        %v929 = vshrl.u32 %v928, 7
        %v930 = vsub.s32 %v923, %v929
        %v931 = vrot.slane %v863, %v930
        %v932 = vlaneseq
        %v933 = vshrl.u32 %v932, 7
        %v934 = vsub.s32 %v923, %v933
        %v935 = vrot.slane %v866, %v934
        %v936 = vlaneseq
        %v937 = vshrl.u32 %v936, 7
        %v938 = vsub.s32 %v923, %v937
        %v939 = vrot.slane %v869, %v938
        %v940 = vlaneseq
        %v941 = vshrl.u32 %v940, 7
        %v942 = vsub.s32 %v923, %v941
        %v943 = vrot.slane %v872, %v942
        %v944 = vlaneseq
        %v945 = vshrl.u32 %v944, 7
        %v946 = vsub.s32 %v923, %v945
        %v947 = vrot.slane %v875, %v946
        %v948 = vlaneseq
        %v949 = vshrl.u32 %v948, 7
        %v950 = vsub.s32 %v923, %v949
        %v951 = vrot.slane %v878, %v950
        %v952 = vlaneseq
        %v953 = vshrl.u32 %v952, 7
        %v954 = vsub.s32 %v923, %v953
        %v955 = vrot.slane %v881, %v954
        %v956 = vlaneseq
        %v957 = vshrl.u32 %v956, 7
        %v958 = vsub.s32 %v923, %v957
        %v959 = vrot.slane %v884, %v958
        %v960 = vlaneseq
        %v961 = vshrl.u32 %v960, 7
        %v962 = vsub.s32 %v923, %v961
        %v963 = vrot.slane %v887, %v962
        %v964 = vlaneseq
        %v965 = vshrl.u32 %v964, 7
        %v966 = vsub.s32 %v923, %v965
        %v967 = vrot.slane %v890, %v966
        %v968 = vlaneseq
        %v969 = vshrl.u32 %v968, 7
        %v970 = vsub.s32 %v923, %v969
        %v971 = vrot.slane %v893, %v970
        %v972 = vlaneseq
        %v973 = vshrl.u32 %v972, 7
        %v974 = vsub.s32 %v923, %v973
        %v975 = vrot.slane %v896, %v974
        %v976 = vlaneseq
        %v977 = vshrl.u32 %v976, 7
        %v978 = vsub.s32 %v923, %v977
        %v979 = vrot.slane %v899, %v978
        %v980 = vlaneseq
        %v981 = vshrl.u32 %v980, 7
        %v982 = vsub.s32 %v923, %v981
        %v983 = vrot.slane %v902, %v982
        %v984 = vlaneseq
        %v985 = vshrl.u32 %v984, 7
        %v986 = vsub.s32 %v923, %v985
        %v987 = vrot.slane %v905, %v986
        %vm988 = vcmask 1041409
        %v989 = vsel %vm988, %v931, %v927
        %vm990 = vcmask 1042434
        %v991 = vsel %vm990, %v935, %v989
        %vm992 = vcmask 1043459
        %v993 = vsel %vm992, %v939, %v991
        %vm994 = vcmask 1044484
        %v995 = vsel %vm994, %v943, %v993
        %vm996 = vcmask 1045509
        %v997 = vsel %vm996, %v947, %v995
        %vm998 = vcmask 1046534
        %v999 = vsel %vm998, %v951, %v997
        %vm1000 = vcmask 1047559
        %v1001 = vsel %vm1000, %v955, %v999
        %v1002 = vsel %vm988, %v963, %v959
        %v1003 = vsel %vm990, %v967, %v1002
        %v1004 = vsel %vm992, %v971, %v1003
        %v1005 = vsel %vm994, %v975, %v1004
        %v1006 = vsel %vm996, %v979, %v1005
        %v1007 = vsel %vm998, %v983, %v1006
        %v1008 = vsel %vm1000, %v987, %v1007
        %vm1011 = vcmask 64512
        %v1012 = vsel %vm1011, %v1001, -inf
        %1013 = vmax.xlane.f32.xlu0 %v1012
        %v1014 = vpop.xlane.xlu0 %1013
        %v1015 = vsel %vm1011, %v1008, -inf
        %1016 = vmax.xlane.f32.xlu0 %v1015
        %v1017 = vpop.xlane.xlu0 %1016
        %v1020 = vlaneseq
        %v1021 = vshrl.u32 %v1020, 7
        %v1022 = vsub.s32 0, %v1021
        %v1023 = vrot.slane %v1014, %v1022
        %v1024 = vlaneseq
        %v1025 = vshrl.u32 %v1024, 7
        %v1026 = vsub.s32 1, %v1025
        %v1027 = vrot.slane %v1014, %v1026
        %v1028 = vlaneseq
        %v1029 = vshrl.u32 %v1028, 7
        %v1030 = vsub.s32 2, %v1029
        %v1031 = vrot.slane %v1014, %v1030
        %v1032 = vlaneseq
        %v1033 = vshrl.u32 %v1032, 7
        %v1034 = vsub.s32 3, %v1033
        %v1035 = vrot.slane %v1014, %v1034
        %v1036 = vlaneseq
        %v1037 = vshrl.u32 %v1036, 7
        %v1038 = vsub.s32 4, %v1037
        %v1039 = vrot.slane %v1014, %v1038
        %v1040 = vlaneseq
        %v1041 = vshrl.u32 %v1040, 7
        %v1042 = vsub.s32 5, %v1041
        %v1043 = vrot.slane %v1014, %v1042
        %v1044 = vlaneseq
        %v1045 = vshrl.u32 %v1044, 7
        %v1046 = vsub.s32 6, %v1045
        %v1047 = vrot.slane %v1014, %v1046
        %v1048 = vlaneseq
        %v1049 = vshrl.u32 %v1048, 7
        %v1050 = vsub.s32 7, %v1049
        %v1051 = vrot.slane %v1014, %v1050
        %v1052 = vlaneseq
        %v1053 = vshrl.u32 %v1052, 7
        %v1054 = vsub.s32 0, %v1053
        %v1055 = vrot.slane %v1017, %v1054
        %v1056 = vlaneseq
        %v1057 = vshrl.u32 %v1056, 7
        %v1058 = vsub.s32 1, %v1057
        %v1059 = vrot.slane %v1017, %v1058
        %v1060 = vlaneseq
        %v1061 = vshrl.u32 %v1060, 7
        %v1062 = vsub.s32 2, %v1061
        %v1063 = vrot.slane %v1017, %v1062
        %v1064 = vlaneseq
        %v1065 = vshrl.u32 %v1064, 7
        %v1066 = vsub.s32 3, %v1065
        %v1067 = vrot.slane %v1017, %v1066
        %v1068 = vlaneseq
        %v1069 = vshrl.u32 %v1068, 7
        %v1070 = vsub.s32 4, %v1069
        %v1071 = vrot.slane %v1017, %v1070
        %v1072 = vlaneseq
        %v1073 = vshrl.u32 %v1072, 7
        %v1074 = vsub.s32 5, %v1073
        %v1075 = vrot.slane %v1017, %v1074
        %v1076 = vlaneseq
        %v1077 = vshrl.u32 %v1076, 7
        %v1078 = vsub.s32 6, %v1077
        %v1079 = vrot.slane %v1017, %v1078
        %v1080 = vlaneseq
        %v1081 = vshrl.u32 %v1080, 7
        %v1082 = vsub.s32 7, %v1081
        %v1083 = vrot.slane %v1017, %v1082
        %v1100 = vsub.f32 %v860, %v1023
        %v1101 = vsub.f32 %v863, %v1027
        %v1102 = vsub.f32 %v866, %v1031
        %v1103 = vsub.f32 %v869, %v1035
        %v1104 = vsub.f32 %v872, %v1039
        %v1105 = vsub.f32 %v875, %v1043
        %v1106 = vsub.f32 %v878, %v1047
        %v1107 = vsub.f32 %v881, %v1051
        %v1108 = vsub.f32 %v884, %v1055
        %v1109 = vsub.f32 %v887, %v1059
        %v1110 = vsub.f32 %v890, %v1063
        %v1111 = vsub.f32 %v893, %v1067
        %v1112 = vsub.f32 %v896, %v1071
        %v1113 = vsub.f32 %v899, %v1075
        %v1114 = vsub.f32 %v902, %v1079
        %v1115 = vsub.f32 %v905, %v1083
        %v1116 = vmul.f32 %v1100, 1.442695
        %v1117 = vpow.pop %v1116
        %v1118 = vmul.f32 %v1101, 1.442695
        %v1119 = vpow.pop %v1118
        %v1120 = vmul.f32 %v1102, 1.442695
        %v1121 = vpow.pop %v1120
        %v1122 = vmul.f32 %v1103, 1.442695
        %v1123 = vpow.pop %v1122
        %v1124 = vmul.f32 %v1104, 1.442695
        %v1125 = vpow.pop %v1124
        %v1126 = vmul.f32 %v1105, 1.442695
        %v1127 = vpow.pop %v1126
        %v1128 = vmul.f32 %v1106, 1.442695
        %v1129 = vpow.pop %v1128
        %v1130 = vmul.f32 %v1107, 1.442695
        %v1131 = vpow.pop %v1130
        %v1132 = vmul.f32 %v1108, 1.442695
        %v1133 = vpow.pop %v1132
        %v1134 = vmul.f32 %v1109, 1.442695
        %v1135 = vpow.pop %v1134
        %v1136 = vmul.f32 %v1110, 1.442695
        %v1137 = vpow.pop %v1136
        %v1138 = vmul.f32 %v1111, 1.442695
        %v1139 = vpow.pop %v1138
        %v1140 = vmul.f32 %v1112, 1.442695
        %v1141 = vpow.pop %v1140
        %v1142 = vmul.f32 %v1113, 1.442695
        %v1143 = vpow.pop %v1142
        %v1144 = vmul.f32 %v1114, 1.442695
        %v1145 = vpow.pop %v1144
        %v1146 = vmul.f32 %v1115, 1.442695
        %v1147 = vpow.pop %v1146
        %1164 = vset.pattern.permute.xlu0 0
        %1165 = vperm.xlu0 %1164, %v1117
        %v1166 = vpop.permute.xlu0 %1165
        %1167 = vset.pattern.permute.xlu0 0
        %1168 = vperm.xlu0 %1167, %v1119
        %v1169 = vpop.permute.xlu0 %1168
        %1170 = vset.pattern.permute.xlu0 0
        %1171 = vperm.xlu0 %1170, %v1121
        %v1172 = vpop.permute.xlu0 %1171
        %1173 = vset.pattern.permute.xlu0 0
        %1174 = vperm.xlu0 %1173, %v1123
        %v1175 = vpop.permute.xlu0 %1174
        %1176 = vset.pattern.permute.xlu0 0
        %1177 = vperm.xlu0 %1176, %v1125
        %v1178 = vpop.permute.xlu0 %1177
        %1179 = vset.pattern.permute.xlu0 0
        %1180 = vperm.xlu0 %1179, %v1127
        %v1181 = vpop.permute.xlu0 %1180
        %1182 = vset.pattern.permute.xlu0 0
        %1183 = vperm.xlu0 %1182, %v1129
        %v1184 = vpop.permute.xlu0 %1183
        %1185 = vset.pattern.permute.xlu0 0
        %1186 = vperm.xlu0 %1185, %v1131
        %v1187 = vpop.permute.xlu0 %1186
        %1188 = vset.pattern.permute.xlu0 0
        %1189 = vperm.xlu0 %1188, %v1133
        %v1190 = vpop.permute.xlu0 %1189
        %1191 = vset.pattern.permute.xlu0 0
        %1192 = vperm.xlu0 %1191, %v1135
        %v1193 = vpop.permute.xlu0 %1192
        %1194 = vset.pattern.permute.xlu0 0
        %1195 = vperm.xlu0 %1194, %v1137
        %v1196 = vpop.permute.xlu0 %1195
        %1197 = vset.pattern.permute.xlu0 0
        %1198 = vperm.xlu0 %1197, %v1139
        %v1199 = vpop.permute.xlu0 %1198
        %1200 = vset.pattern.permute.xlu0 0
        %1201 = vperm.xlu0 %1200, %v1141
        %v1202 = vpop.permute.xlu0 %1201
        %1203 = vset.pattern.permute.xlu0 0
        %1204 = vperm.xlu0 %1203, %v1143
        %v1205 = vpop.permute.xlu0 %1204
        %1206 = vset.pattern.permute.xlu0 0
        %1207 = vperm.xlu0 %1206, %v1145
        %v1208 = vpop.permute.xlu0 %1207
        %1209 = vset.pattern.permute.xlu0 0
        %1210 = vperm.xlu0 %1209, %v1147
        %v1211 = vpop.permute.xlu0 %1210
        %v1212 = vlaneseq
        %v1213 = vshrl.u32 %v1212, 7
        %v1214 = vsub.s32 %v923, %v1213
        %v1215 = vrot.slane %v1166, %v1214
        %v1216 = vlaneseq
        %v1217 = vshrl.u32 %v1216, 7
        %v1218 = vsub.s32 %v923, %v1217
        %v1219 = vrot.slane %v1169, %v1218
        %v1220 = vlaneseq
        %v1221 = vshrl.u32 %v1220, 7
        %v1222 = vsub.s32 %v923, %v1221
        %v1223 = vrot.slane %v1172, %v1222
        %v1224 = vlaneseq
        %v1225 = vshrl.u32 %v1224, 7
        %v1226 = vsub.s32 %v923, %v1225
        %v1227 = vrot.slane %v1175, %v1226
        %v1228 = vlaneseq
        %v1229 = vshrl.u32 %v1228, 7
        %v1230 = vsub.s32 %v923, %v1229
        %v1231 = vrot.slane %v1178, %v1230
        %v1232 = vlaneseq
        %v1233 = vshrl.u32 %v1232, 7
        %v1234 = vsub.s32 %v923, %v1233
        %v1235 = vrot.slane %v1181, %v1234
        %v1236 = vlaneseq
        %v1237 = vshrl.u32 %v1236, 7
        %v1238 = vsub.s32 %v923, %v1237
        %v1239 = vrot.slane %v1184, %v1238
        %v1240 = vlaneseq
        %v1241 = vshrl.u32 %v1240, 7
        %v1242 = vsub.s32 %v923, %v1241
        %v1243 = vrot.slane %v1187, %v1242
        %v1244 = vlaneseq
        %v1245 = vshrl.u32 %v1244, 7
        %v1246 = vsub.s32 %v923, %v1245
        %v1247 = vrot.slane %v1190, %v1246
        %v1248 = vlaneseq
        %v1249 = vshrl.u32 %v1248, 7
        %v1250 = vsub.s32 %v923, %v1249
        %v1251 = vrot.slane %v1193, %v1250
        %v1252 = vlaneseq
        %v1253 = vshrl.u32 %v1252, 7
        %v1254 = vsub.s32 %v923, %v1253
        %v1255 = vrot.slane %v1196, %v1254
        %v1256 = vlaneseq
        %v1257 = vshrl.u32 %v1256, 7
        %v1258 = vsub.s32 %v923, %v1257
        %v1259 = vrot.slane %v1199, %v1258
        %v1260 = vlaneseq
        %v1261 = vshrl.u32 %v1260, 7
        %v1262 = vsub.s32 %v923, %v1261
        %v1263 = vrot.slane %v1202, %v1262
        %v1264 = vlaneseq
        %v1265 = vshrl.u32 %v1264, 7
        %v1266 = vsub.s32 %v923, %v1265
        %v1267 = vrot.slane %v1205, %v1266
        %v1268 = vlaneseq
        %v1269 = vshrl.u32 %v1268, 7
        %v1270 = vsub.s32 %v923, %v1269
        %v1271 = vrot.slane %v1208, %v1270
        %v1272 = vlaneseq
        %v1273 = vshrl.u32 %v1272, 7
        %v1274 = vsub.s32 %v923, %v1273
        %v1275 = vrot.slane %v1211, %v1274
        %v1276 = vsel %vm988, %v1219, %v1215
        %v1277 = vsel %vm990, %v1223, %v1276
        %v1278 = vsel %vm992, %v1227, %v1277
        %v1279 = vsel %vm994, %v1231, %v1278
        %v1280 = vsel %vm996, %v1235, %v1279
        %v1281 = vsel %vm998, %v1239, %v1280
        %v1282 = vsel %vm1000, %v1243, %v1281
        %v1283 = vsel %vm988, %v1251, %v1247
        %v1284 = vsel %vm990, %v1255, %v1283
        %v1285 = vsel %vm992, %v1259, %v1284
        %v1286 = vsel %vm994, %v1263, %v1285
        %v1287 = vsel %vm996, %v1267, %v1286
        %v1288 = vsel %vm998, %v1271, %v1287
        %v1289 = vsel %vm1000, %v1275, %v1288
        %v1292 = vsel %vm1011, %v1282, 0.0
        %1293 = vadd.xlane.f32.xlu0 %v1292
        %v1294 = vpop.xlane.xlu0 %1293
        %v1295 = vsel %vm1011, %v1289, 0.0
        %1296 = vadd.xlane.f32.xlu0 %v1295
        %v1297 = vpop.xlane.xlu0 %1296
        %v1298 = vrcp.pop %v1294
        %v1299 = vrcp.pop %v1297
        %v1302 = vlaneseq
        %v1303 = vshrl.u32 %v1302, 7
        %v1304 = vsub.s32 0, %v1303
        %v1305 = vrot.slane %v1298, %v1304
        %v1306 = vlaneseq
        %v1307 = vshrl.u32 %v1306, 7
        %v1308 = vsub.s32 1, %v1307
        %v1309 = vrot.slane %v1298, %v1308
        %v1310 = vlaneseq
        %v1311 = vshrl.u32 %v1310, 7
        %v1312 = vsub.s32 2, %v1311
        %v1313 = vrot.slane %v1298, %v1312
        %v1314 = vlaneseq
        %v1315 = vshrl.u32 %v1314, 7
        %v1316 = vsub.s32 3, %v1315
        %v1317 = vrot.slane %v1298, %v1316
        %v1318 = vlaneseq
        %v1319 = vshrl.u32 %v1318, 7
        %v1320 = vsub.s32 4, %v1319
        %v1321 = vrot.slane %v1298, %v1320
        %v1322 = vlaneseq
        %v1323 = vshrl.u32 %v1322, 7
        %v1324 = vsub.s32 5, %v1323
        %v1325 = vrot.slane %v1298, %v1324
        %v1326 = vlaneseq
        %v1327 = vshrl.u32 %v1326, 7
        %v1328 = vsub.s32 6, %v1327
        %v1329 = vrot.slane %v1298, %v1328
        %v1330 = vlaneseq
        %v1331 = vshrl.u32 %v1330, 7
        %v1332 = vsub.s32 7, %v1331
        %v1333 = vrot.slane %v1298, %v1332
        %v1334 = vlaneseq
        %v1335 = vshrl.u32 %v1334, 7
        %v1336 = vsub.s32 0, %v1335
        %v1337 = vrot.slane %v1299, %v1336
        %v1338 = vlaneseq
        %v1339 = vshrl.u32 %v1338, 7
        %v1340 = vsub.s32 1, %v1339
        %v1341 = vrot.slane %v1299, %v1340
        %v1342 = vlaneseq
        %v1343 = vshrl.u32 %v1342, 7
        %v1344 = vsub.s32 2, %v1343
        %v1345 = vrot.slane %v1299, %v1344
        %v1346 = vlaneseq
        %v1347 = vshrl.u32 %v1346, 7
        %v1348 = vsub.s32 3, %v1347
        %v1349 = vrot.slane %v1299, %v1348
        %v1350 = vlaneseq
        %v1351 = vshrl.u32 %v1350, 7
        %v1352 = vsub.s32 4, %v1351
        %v1353 = vrot.slane %v1299, %v1352
        %v1354 = vlaneseq
        %v1355 = vshrl.u32 %v1354, 7
        %v1356 = vsub.s32 5, %v1355
        %v1357 = vrot.slane %v1299, %v1356
        %v1358 = vlaneseq
        %v1359 = vshrl.u32 %v1358, 7
        %v1360 = vsub.s32 6, %v1359
        %v1361 = vrot.slane %v1299, %v1360
        %v1362 = vlaneseq
        %v1363 = vshrl.u32 %v1362, 7
        %v1364 = vsub.s32 7, %v1363
        %v1365 = vrot.slane %v1299, %v1364
        %v1382 = vmul.f32 %v1117, %v1305
        %v1383 = vmul.f32 %v1119, %v1309
        %v1384 = vmul.f32 %v1121, %v1313
        %v1385 = vmul.f32 %v1123, %v1317
        %v1386 = vmul.f32 %v1125, %v1321
        %v1387 = vmul.f32 %v1127, %v1325
        %v1388 = vmul.f32 %v1129, %v1329
        %v1389 = vmul.f32 %v1131, %v1333
        %v1390 = vmul.f32 %v1133, %v1337
        %v1391 = vmul.f32 %v1135, %v1341
        %v1392 = vmul.f32 %v1137, %v1345
        %v1393 = vmul.f32 %v1139, %v1349
        %v1394 = vmul.f32 %v1141, %v1353
        %v1395 = vmul.f32 %v1143, %v1357
        %v1396 = vmul.f32 %v1145, %v1361
        %v1397 = vmul.f32 %v1147, %v1365
        %1399 = vset.pattern.permute.xlu0 0
        %1400 = vperm.xlu0 %1399, %v1382
        %v1401 = vpop.permute.xlu0 %1400
        %1404 = vset.pattern.permute.xlu0 0
        %1405 = vperm.xlu0 %1404, %v1383
        %v1406 = vpop.permute.xlu0 %1405
        %1409 = vset.pattern.permute.xlu0 0
        %1410 = vperm.xlu0 %1409, %v1384
        %v1411 = vpop.permute.xlu0 %1410
        %1414 = vset.pattern.permute.xlu0 0
        %1415 = vperm.xlu0 %1414, %v1385
        %v1416 = vpop.permute.xlu0 %1415
        %1419 = vset.pattern.permute.xlu0 0
        %1420 = vperm.xlu0 %1419, %v1386
        %v1421 = vpop.permute.xlu0 %1420
        %1424 = vset.pattern.permute.xlu0 0
        %1425 = vperm.xlu0 %1424, %v1387
        %v1426 = vpop.permute.xlu0 %1425
        %1429 = vset.pattern.permute.xlu0 0
        %1430 = vperm.xlu0 %1429, %v1388
        %v1431 = vpop.permute.xlu0 %1430
        %1434 = vset.pattern.permute.xlu0 0
        %1435 = vperm.xlu0 %1434, %v1389
        %v1436 = vpop.permute.xlu0 %1435
        %1439 = vset.pattern.permute.xlu0 0
        %1440 = vperm.xlu0 %1439, %v1390
        %v1441 = vpop.permute.xlu0 %1440
        %1444 = vset.pattern.permute.xlu0 0
        %1445 = vperm.xlu0 %1444, %v1391
        %v1446 = vpop.permute.xlu0 %1445
        %1449 = vset.pattern.permute.xlu0 0
        %1450 = vperm.xlu0 %1449, %v1392
        %v1451 = vpop.permute.xlu0 %1450
        %1454 = vset.pattern.permute.xlu0 0
        %1455 = vperm.xlu0 %1454, %v1393
        %v1456 = vpop.permute.xlu0 %1455
        %1459 = vset.pattern.permute.xlu0 0
        %1460 = vperm.xlu0 %1459, %v1394
        %v1461 = vpop.permute.xlu0 %1460
        %1464 = vset.pattern.permute.xlu0 0
        %1465 = vperm.xlu0 %1464, %v1395
        %v1466 = vpop.permute.xlu0 %1465
        %1469 = vset.pattern.permute.xlu0 0
        %1470 = vperm.xlu0 %1469, %v1396
        %v1471 = vpop.permute.xlu0 %1470
        %1474 = vset.pattern.permute.xlu0 0
        %1475 = vperm.xlu0 %1474, %v1397
        %v1476 = vpop.permute.xlu0 %1475
        %v1478 = vmul.f32 %v316, %v1401
        %v1479 = vmul.f32 %v317, %v1406
        %v1480 = vmul.f32 %v318, %v1411
        %v1481 = vmul.f32 %v319, %v1416
        %v1482 = vmul.f32 %v320, %v1421
        %v1483 = vmul.f32 %v321, %v1426
        %v1484 = vmul.f32 %v322, %v1431
        %v1485 = vmul.f32 %v323, %v1436
        %v1486 = vmul.f32 %v324, %v1441
        %v1487 = vmul.f32 %v325, %v1446
        %v1488 = vmul.f32 %v326, %v1451
        %v1489 = vmul.f32 %v327, %v1456
        %v1490 = vmul.f32 %v328, %v1461
        %v1491 = vmul.f32 %v329, %v1466
        %v1492 = vmul.f32 %v330, %v1471
        %v1493 = vmul.f32 %v331, %v1476
        %v1494 = vsel %vm336, %v1478, 0.0
        %v1495 = vrot.slane %v1494, 4
        %v1496 = vadd.f32 %v1494, %v1495
        %v1497 = vrot.slane %v1496, 2
        %v1498 = vadd.f32 %v1496, %v1497
        %v1499 = vrot.slane %v1498, 1
        %v1500 = vadd.f32 %v1498, %v1499
        %v1501 = vsel %vm336, %v1479, 0.0
        %v1502 = vrot.slane %v1501, 4
        %v1503 = vadd.f32 %v1501, %v1502
        %v1504 = vrot.slane %v1503, 2
        %v1505 = vadd.f32 %v1503, %v1504
        %v1506 = vrot.slane %v1505, 1
        %v1507 = vadd.f32 %v1505, %v1506
        %v1508 = vsel %vm336, %v1480, 0.0
        %v1509 = vrot.slane %v1508, 4
        %v1510 = vadd.f32 %v1508, %v1509
        %v1511 = vrot.slane %v1510, 2
        %v1512 = vadd.f32 %v1510, %v1511
        %v1513 = vrot.slane %v1512, 1
        %v1514 = vadd.f32 %v1512, %v1513
        %v1515 = vsel %vm336, %v1481, 0.0
        %v1516 = vrot.slane %v1515, 4
        %v1517 = vadd.f32 %v1515, %v1516
        %v1518 = vrot.slane %v1517, 2
        %v1519 = vadd.f32 %v1517, %v1518
        %v1520 = vrot.slane %v1519, 1
        %v1521 = vadd.f32 %v1519, %v1520
        %v1522 = vsel %vm336, %v1482, 0.0
        %v1523 = vrot.slane %v1522, 4
        %v1524 = vadd.f32 %v1522, %v1523
        %v1525 = vrot.slane %v1524, 2
        %v1526 = vadd.f32 %v1524, %v1525
        %v1527 = vrot.slane %v1526, 1
        %v1528 = vadd.f32 %v1526, %v1527
        %v1529 = vsel %vm336, %v1483, 0.0
        %v1530 = vrot.slane %v1529, 4
        %v1531 = vadd.f32 %v1529, %v1530
        %v1532 = vrot.slane %v1531, 2
        %v1533 = vadd.f32 %v1531, %v1532
        %v1534 = vrot.slane %v1533, 1
        %v1535 = vadd.f32 %v1533, %v1534
        %v1536 = vsel %vm336, %v1484, 0.0
        %v1537 = vrot.slane %v1536, 4
        %v1538 = vadd.f32 %v1536, %v1537
        %v1539 = vrot.slane %v1538, 2
        %v1540 = vadd.f32 %v1538, %v1539
        %v1541 = vrot.slane %v1540, 1
        %v1542 = vadd.f32 %v1540, %v1541
        %v1543 = vsel %vm336, %v1485, 0.0
        %v1544 = vrot.slane %v1543, 4
        %v1545 = vadd.f32 %v1543, %v1544
        %v1546 = vrot.slane %v1545, 2
        %v1547 = vadd.f32 %v1545, %v1546
        %v1548 = vrot.slane %v1547, 1
        %v1549 = vadd.f32 %v1547, %v1548
        %v1550 = vsel %vm336, %v1486, 0.0
        %v1551 = vrot.slane %v1550, 4
        %v1552 = vadd.f32 %v1550, %v1551
        %v1553 = vrot.slane %v1552, 2
        %v1554 = vadd.f32 %v1552, %v1553
        %v1555 = vrot.slane %v1554, 1
        %v1556 = vadd.f32 %v1554, %v1555
        %v1557 = vsel %vm336, %v1487, 0.0
        %v1558 = vrot.slane %v1557, 4
        %v1559 = vadd.f32 %v1557, %v1558
        %v1560 = vrot.slane %v1559, 2
        %v1561 = vadd.f32 %v1559, %v1560
        %v1562 = vrot.slane %v1561, 1
        %v1563 = vadd.f32 %v1561, %v1562
        %v1564 = vsel %vm336, %v1488, 0.0
        %v1565 = vrot.slane %v1564, 4
        %v1566 = vadd.f32 %v1564, %v1565
        %v1567 = vrot.slane %v1566, 2
        %v1568 = vadd.f32 %v1566, %v1567
        %v1569 = vrot.slane %v1568, 1
        %v1570 = vadd.f32 %v1568, %v1569
        %v1571 = vsel %vm336, %v1489, 0.0
        %v1572 = vrot.slane %v1571, 4
        %v1573 = vadd.f32 %v1571, %v1572
        %v1574 = vrot.slane %v1573, 2
        %v1575 = vadd.f32 %v1573, %v1574
        %v1576 = vrot.slane %v1575, 1
        %v1577 = vadd.f32 %v1575, %v1576
        %v1578 = vsel %vm336, %v1490, 0.0
        %v1579 = vrot.slane %v1578, 4
        %v1580 = vadd.f32 %v1578, %v1579
        %v1581 = vrot.slane %v1580, 2
        %v1582 = vadd.f32 %v1580, %v1581
        %v1583 = vrot.slane %v1582, 1
        %v1584 = vadd.f32 %v1582, %v1583
        %v1585 = vsel %vm336, %v1491, 0.0
        %v1586 = vrot.slane %v1585, 4
        %v1587 = vadd.f32 %v1585, %v1586
        %v1588 = vrot.slane %v1587, 2
        %v1589 = vadd.f32 %v1587, %v1588
        %v1590 = vrot.slane %v1589, 1
        %v1591 = vadd.f32 %v1589, %v1590
        %v1592 = vsel %vm336, %v1492, 0.0
        %v1593 = vrot.slane %v1592, 4
        %v1594 = vadd.f32 %v1592, %v1593
        %v1595 = vrot.slane %v1594, 2
        %v1596 = vadd.f32 %v1594, %v1595
        %v1597 = vrot.slane %v1596, 1
        %v1598 = vadd.f32 %v1596, %v1597
        %v1599 = vsel %vm336, %v1493, 0.0
        %v1600 = vrot.slane %v1599, 4
        %v1601 = vadd.f32 %v1599, %v1600
        %v1602 = vrot.slane %v1601, 2
        %v1603 = vadd.f32 %v1601, %v1602
        %v1604 = vrot.slane %v1603, 1
        %v1605 = vadd.f32 %v1603, %v1604
        %v1622 = vsel %vm988, %v1507, %v1500
        %v1623 = vsel %vm990, %v1514, %v1622
        %v1624 = vsel %vm992, %v1521, %v1623
        %v1625 = vsel %vm994, %v1528, %v1624
        %v1626 = vsel %vm996, %v1535, %v1625
        %v1627 = vsel %vm998, %v1542, %v1626
        %v1628 = vsel %vm1000, %v1549, %v1627
        %v1629 = vsel %vm988, %v1563, %v1556
        %v1630 = vsel %vm990, %v1570, %v1629
        %v1631 = vsel %vm992, %v1577, %v1630
        %v1632 = vsel %vm994, %v1584, %v1631
        %v1633 = vsel %vm996, %v1591, %v1632
        %v1634 = vsel %vm998, %v1598, %v1633
        %v1635 = vsel %vm1000, %v1605, %v1634
        %1638 = vst.msk [vmem:[%s289] sm:$0xff] %vm336, %v1628
        %1639 = vst.msk [vmem:[%s289 + $0x8] sm:$0xff] %vm336, %v1635
        %v1640 = vlaneseq
        %v1641 = vshrl.u32 %v1640, 7
        %v1642 = vsub.s32 %v923, %v1641
        %v1643 = vrot.slane %v1401, %v1642
        %v1644 = vlaneseq
        %v1645 = vshrl.u32 %v1644, 7
        %v1646 = vsub.s32 %v923, %v1645
        %v1647 = vrot.slane %v1406, %v1646
        %v1648 = vlaneseq
        %v1649 = vshrl.u32 %v1648, 7
        %v1650 = vsub.s32 %v923, %v1649
        %v1651 = vrot.slane %v1411, %v1650
        %v1652 = vlaneseq
        %v1653 = vshrl.u32 %v1652, 7
        %v1654 = vsub.s32 %v923, %v1653
        %v1655 = vrot.slane %v1416, %v1654
        %v1656 = vlaneseq
        %v1657 = vshrl.u32 %v1656, 7
        %v1658 = vsub.s32 %v923, %v1657
        %v1659 = vrot.slane %v1421, %v1658
        %v1660 = vlaneseq
        %v1661 = vshrl.u32 %v1660, 7
        %v1662 = vsub.s32 %v923, %v1661
        %v1663 = vrot.slane %v1426, %v1662
        %v1664 = vlaneseq
        %v1665 = vshrl.u32 %v1664, 7
        %v1666 = vsub.s32 %v923, %v1665
        %v1667 = vrot.slane %v1431, %v1666
        %v1668 = vlaneseq
        %v1669 = vshrl.u32 %v1668, 7
        %v1670 = vsub.s32 %v923, %v1669
        %v1671 = vrot.slane %v1436, %v1670
        %v1672 = vlaneseq
        %v1673 = vshrl.u32 %v1672, 7
        %v1674 = vsub.s32 %v923, %v1673
        %v1675 = vrot.slane %v1441, %v1674
        %v1676 = vlaneseq
        %v1677 = vshrl.u32 %v1676, 7
        %v1678 = vsub.s32 %v923, %v1677
        %v1679 = vrot.slane %v1446, %v1678
        %v1680 = vlaneseq
        %v1681 = vshrl.u32 %v1680, 7
        %v1682 = vsub.s32 %v923, %v1681
        %v1683 = vrot.slane %v1451, %v1682
        %v1684 = vlaneseq
        %v1685 = vshrl.u32 %v1684, 7
        %v1686 = vsub.s32 %v923, %v1685
        %v1687 = vrot.slane %v1456, %v1686
        %v1688 = vlaneseq
        %v1689 = vshrl.u32 %v1688, 7
        %v1690 = vsub.s32 %v923, %v1689
        %v1691 = vrot.slane %v1461, %v1690
        %v1692 = vlaneseq
        %v1693 = vshrl.u32 %v1692, 7
        %v1694 = vsub.s32 %v923, %v1693
        %v1695 = vrot.slane %v1466, %v1694
        %v1696 = vlaneseq
        %v1697 = vshrl.u32 %v1696, 7
        %v1698 = vsub.s32 %v923, %v1697
        %v1699 = vrot.slane %v1471, %v1698
        %v1700 = vlaneseq
        %v1701 = vshrl.u32 %v1700, 7
        %v1702 = vsub.s32 %v923, %v1701
        %v1703 = vrot.slane %v1476, %v1702
        %v1704 = vsel %vm988, %v1647, %v1643
        %v1705 = vsel %vm990, %v1651, %v1704
        %v1706 = vsel %vm992, %v1655, %v1705
        %v1707 = vsel %vm994, %v1659, %v1706
        %v1708 = vsel %vm996, %v1663, %v1707
        %v1709 = vsel %vm998, %v1667, %v1708
        %v1710 = vsel %vm1000, %v1671, %v1709
        %v1711 = vsel %vm988, %v1679, %v1675
        %v1712 = vsel %vm990, %v1683, %v1711
        %v1713 = vsel %vm992, %v1687, %v1712
        %v1714 = vsel %vm994, %v1691, %v1713
        %v1715 = vsel %vm996, %v1695, %v1714
        %v1716 = vsel %vm998, %v1699, %v1715
        %v1717 = vsel %vm1000, %v1703, %v1716
        %1720 = vst.msk [vmem:[%s314] sm:$0xff] %vm1011, %v1710
        %1721 = vst.msk [vmem:[%s314 + $0x8] sm:$0xff] %vm1011, %v1717
        %s1722 = sand.u32 %s166, 1
        %s1723 = scalar_lea.sflag [#allocation3], %s1722
        %s1724 = sand.u32 %s166, 1
        %s1725 = smul.addr %s1724, 16
        %s1726 = scalar_lea.vmem [#allocation2], %s1725
        %s1727 = smul.u32 2, %s22
        %p1728 = scmp.lt.s32.totalorder %s1727, 3
        %s1729 = scalar_select %p1728, %s1727, 3
        %s1730 = smul.addr %s1729, 8
        %s1731 = scalar_lea.vmem %s7, %s1730
        // Predicated region
        $region45: #{tpu_custom_call.1} parent=43 // pred_check
          %p1732 = pneg %p176
        $region46: #{tpu_custom_call.1} parent=43 // pred_check_branch
          %1734 = sbr.rel (%p1732) target = $region48
        $region47: #{tpu_custom_call.1} parent=43 // pred_region
          %s1735 = smul.u32 2, %s22
          %s1737 = ssub.s32 256, 256
          %1738 = vsyncadd %s1723, %s1737
          %s1739 = smul.addr %s1735, 128
          %s1740 = scalar_lea.hbm %s6, %s1739
          %s1741 = sshll.u32 %s1726, 4
          %s1742 = int_to_ptr.vmem [resolvable:$true] %s1741
          %1747 = dma.vmem_to_hbm [thread:$0]  %s1742, 256, %s1740, %s1723, 128, 128, 8
        $region48: #{tpu_custom_call.1} parent=43 // pred_fallthru
          _
        // Predicated region
        $region49: #{tpu_custom_call.1} parent=43 // pred_check
          %p1748 = pneg %p202
        $region50: #{tpu_custom_call.1} parent=43 // pred_check_branch
          %1750 = sbr.rel (%p1748) target = $region52
        $region51: #{tpu_custom_call.1} parent=43 // pred_region
          %s1751 = smul.u32 2, %s22
        $region52: #{tpu_custom_call.1} parent=43 // pred_fallthru
          _
      $region44: #{tpu_custom_call.1} parent=5 // pred_fallthru
        _
      %p1752 = scmp.le.s32.totalorder 2, %s17
      // Predicated region
      $region53: #{tpu_custom_call.1} parent=5 // pred_check
        %p1753 = pneg %p1752
      $region54: #{tpu_custom_call.1} parent=5 // pred_check_branch
        %1755 = sbr.rel (%p1753) target = $region56
      $region55: #{tpu_custom_call.1} parent=5 // pred_region
        %s1756 = ssub.s32 %s17, 2
        // Predicated region
        $region57: #{tpu_custom_call.1} parent=55 // pred_check
          %p1757 = pneg %p182
        $region58: #{tpu_custom_call.1} parent=55 // pred_check_branch
          %1759 = sbr.rel (%p1757) target = $region60
        $region59: #{tpu_custom_call.1} parent=55 // pred_region
          %s1760 = sand.u32 %s167, 1
          %s1761 = scalar_lea.sflag [#allocation3], %s1760
          %s1762 = sand.u32 %s167, 1
          %s1763 = smul.addr %s1762, 16
          %s1764 = scalar_lea.vmem [#allocation2], %s1763
          %1765 = dma.done %s1761, 256
        $region60: #{tpu_custom_call.1} parent=55 // pred_fallthru
          _
        // Predicated region
        $region61: #{tpu_custom_call.1} parent=55 // pred_check
          %p1766 = pneg %p208
        $region62: #{tpu_custom_call.1} parent=55 // pred_check_branch
          %1768 = sbr.rel (%p1766) target = $region64
        $region63: #{tpu_custom_call.1} parent=55 // pred_region
          %s1769 = smul.u32 2, %s23
          %p1770 = scmp.lt.s32.totalorder %s1769, 3
          %s1771 = scalar_select %p1770, %s1769, 3
          %s1772 = smul.addr %s1771, 8
          %s1773 = scalar_lea.vmem %s7, %s1772
        $region64: #{tpu_custom_call.1} parent=55 // pred_fallthru
          _
      $region56: #{tpu_custom_call.1} parent=5 // pred_fallthru
        _
    $region6: #{tpu_custom_call.1} parent=1 // loop_footer
      %s21 = sadd.s32 1, %s17
    $region7: #{tpu_custom_call.1} parent=1 // loop_footer_branch
      %16 = sbr.rel target = $region3
    $region8: #{tpu_custom_call.1} parent=1 // loop_exit
      _
    %1774 = vsyncpa [#allocation3], 1
    %s1775 = scalar_lea.sflag [#allocation3], 1
    %1776 = vsyncpa %s1775, 1

</llo_original>
